<compile_context>
chip_gen: v6e
topology: v6e:2x2x1
jax: 0.10.0
libtpu: 0.0.40
codegen_flags: <defaults>
</compile_context>

<pallas_src>
import functools

import jax
import jax.numpy as jnp
from jax import lax
from jax.experimental import pallas as pl
from jax.experimental.pallas import tpu as pltpu

BN_EPS = 1e-5

# Logical (PyTorch) feature dims and lane-padded (multiple-of-128) dims.
D_IN, D_H1, D_H2, D_OUT = 784, 300, 100, 10
D_INP, D_H1P, D_H2P, D_OUTP = 896, 384, 128, 128

# Offsets inside the packed per-feature-vector operand (all 128-aligned).
_OFF_G1 = 0
_OFF_BE1 = _OFF_G1 + D_H1P          # 384
_OFF_G2 = _OFF_BE1 + D_H1P          # 768
_OFF_BE2 = _OFF_G2 + D_H2P          # 896
_OFF_B3 = _OFF_BE2 + D_H2P          # 1024
_VEC_LEN = _OFF_B3 + D_OUTP         # 1152


def _bn_relu(z, gamma, beta, inv_b):
    """Training-mode BatchNorm1d (biased batch variance) + ReLU.

    One-pass stats + a single fused scale/shift on the (B, F) tensor.
    Padded (all-zero) feature columns stay exactly 0: gamma/beta padding is 0.
    """
    s = jnp.sum(z, axis=0, keepdims=True)
    s2 = jnp.sum(z * z, axis=0, keepdims=True)
    mu = s * inv_b
    var = s2 * inv_b - mu * mu
    scale = gamma * lax.rsqrt(var + BN_EPS)
    shift = beta - mu * scale
    return jnp.maximum(z * scale + shift, 0.0)


def mlp_kernel(x_ref, w1_ref, w2_ref, w3_ref, vec_ref, o_ref, *, batch):
    """Fused 3-layer MLP. `batch` is the LOGICAL batch size (static); x_ref may carry
    zero-padded rows up to a sublane multiple of 8."""
    b_pad = x_ref.shape[0]
    inv_b = 1.0 / batch  # BN stats over the logical batch only.

    g1 = vec_ref[:, _OFF_G1:_OFF_BE1]
    be1 = vec_ref[:, _OFF_BE1:_OFF_G2]
    g2 = vec_ref[:, _OFF_G2:_OFF_BE2]
    be2 = vec_ref[:, _OFF_BE2:_OFF_B3]
    b3 = vec_ref[:, _OFF_B3:_VEC_LEN]

    # Layer 1: Linear(784,300) [bias dead under training-mode BN] + BN + ReLU.
    # Padded batch rows of z1 are exactly 0 (zero x rows, no bias) -> BN1 stats exact.
    z1 = jnp.dot(x_ref[...], w1_ref[...], preferred_element_type=jnp.float32)
    h1 = _bn_relu(z1, g1, be1, inv_b)                                  # (B_pad, 384) f32
    if b_pad != batch:
        # BN1's shift made the padded rows non-zero; re-zero them so layer-2 BN stats
        # stay exact. Static branch: no select is emitted when B is already aligned.
        row_mask = lax.broadcasted_iota(jnp.int32, (b_pad, 1), 0) < batch
        h1 = jnp.where(row_mask, h1, 0.0)
    h1 = h1.astype(jnp.bfloat16)

    # Layer 2: Linear(300,100) [bias dead] + BN + ReLU.
    z2 = jnp.dot(h1, w2_ref[...], preferred_element_type=jnp.float32)
    h2 = _bn_relu(z2, g2, be2, inv_b).astype(jnp.bfloat16)             # (B_pad, 128)

    # Layer 3: Linear(100,10) + bias (lane-padded to 128 output columns). Padded rows
    # of the output are never read back (wrapper slices [:B, :10]).
    out = jnp.dot(h2, w3_ref[...], preferred_element_type=jnp.float32) + b3
    o_ref[...] = out.astype(o_ref.dtype)                               # (B_pad, 128)


@jax.jit
def fully_connected_net(x, kparams):
    """x: (B, 784) float32. kparams: kernel-ready padded params from pack_params()."""
    B = x.shape[0]
    B_pad = ((B + 7) // 8) * 8  # sublane-align the batch (static under jit)
    x_p = jnp.pad(x, ((0, B_pad - B), (0, D_INP - D_IN))).astype(jnp.bfloat16)
    vmem_spec = pl.BlockSpec(memory_space=pltpu.MemorySpace.VMEM)
    out_p = pl.pallas_call(
        functools.partial(mlp_kernel, batch=B),
        out_shape=jax.ShapeDtypeStruct((B_pad, D_OUTP), jnp.float32),
        in_specs=[vmem_spec] * 5,
        out_specs=vmem_spec,
        compiler_params=pltpu.CompilerParams(vmem_limit_bytes=8 << 20),
    )(x_p, kparams["w1"], kparams["w2"], kparams["w3"], kparams["vec"])
    return out_p[:B, :D_OUT]


def init_params(key):
    """PyTorch-default init: Linear W,b ~ U(-1/sqrt(fan_in), 1/sqrt(fan_in));
    BatchNorm1d gamma=1, beta=0. Weights stored as (in_features, out_features)."""
    dims = [(D_IN, D_H1), (D_H1, D_H2), (D_H2, D_OUT)]
    lin = []
    for fan_in, fan_out in dims:
        key, kw, kb = jax.random.split(key, 3)
        bound = 1.0 / jnp.sqrt(fan_in)
        w = jax.random.uniform(kw, (fan_in, fan_out), jnp.float32, -bound, bound)
        b = jax.random.uniform(kb, (1, fan_out), jnp.float32, -bound, bound)
        lin.append((w, b))
    (w1, b1), (w2, b2), (w3, b3) = lin
    return dict(
        w1=w1, b1=b1, g1=jnp.ones((1, D_H1), jnp.float32), be1=jnp.zeros((1, D_H1), jnp.float32),
        w2=w2, b2=b2, g2=jnp.ones((1, D_H2), jnp.float32), be2=jnp.zeros((1, D_H2), jnp.float32),
        w3=w3, b3=b3)


def _pad_to(a, shape):
    return jnp.pad(a, [(0, t - s) for s, t in zip(a.shape, shape)])


def pack_params(p):
    """Zero-pad to lane-aligned dims, cast matmul weights to bf16, and concat the small
    per-feature vectors into one operand. b1/b2 are intentionally omitted (exactly
    cancelled by training-mode BN's batch-mean subtraction)."""
    w1 = _pad_to(p["w1"], (D_INP, D_H1P)).astype(jnp.bfloat16)
    w2 = _pad_to(p["w2"], (D_H1P, D_H2P)).astype(jnp.bfloat16)
    w3 = _pad_to(p["w3"], (D_H2P, D_OUTP)).astype(jnp.bfloat16)
    vec = jnp.concatenate(
        [_pad_to(p["g1"], (1, D_H1P)),
         _pad_to(p["be1"], (1, D_H1P)),
         _pad_to(p["g2"], (1, D_H2P)),
         _pad_to(p["be2"], (1, D_H2P)),
         _pad_to(p["b3"], (1, D_OUTP))], axis=1).astype(jnp.float32)  # (1, 1152)
    return dict(w1=w1, w2=w2, w3=w3, vec=vec)


def reference_forward_f32(x, p):
    """Module-faithful pure-JAX f32 reference (training-mode BN, with biases)."""
    def block(h, w, b, g, be):
        z = h @ w + b
        mu = jnp.mean(z, axis=0, keepdims=True)
        var = jnp.mean((z - mu) ** 2, axis=0, keepdims=True)
        return jnp.maximum((z - mu) / jnp.sqrt(var + BN_EPS) * g + be, 0.0)
    h = block(x, p["w1"], p["b1"], p["g1"], p["be1"])
    h = block(h, p["w2"], p["b2"], p["g2"], p["be2"])
    return h @ p["w3"] + p["b3"]


def reference_forward_bf16(x, p):
    """Pure-JAX emulation of the kernel's numerics (bf16 matmul inputs, f32 BN)."""
    def block(h, w, g, be):
        z = jnp.dot(h.astype(jnp.bfloat16), w.astype(jnp.bfloat16),
                    preferred_element_type=jnp.float32)
        mu = jnp.mean(z, axis=0, keepdims=True)
        var = jnp.mean(z * z, axis=0, keepdims=True) - mu * mu
        scale = g * lax.rsqrt(var + BN_EPS)
        return jnp.maximum(z * scale + (be - mu * scale), 0.0).astype(jnp.bfloat16)
    h = block(x, p["w1"], p["g1"], p["be1"])
    h = block(h, p["w2"], p["g2"], p["be2"])
    return jnp.dot(h, p["w3"].astype(jnp.bfloat16),
                   preferred_element_type=jnp.float32) + p["b3"]


def _check(out, x, params):
    # Tight check vs a reference emulating the kernel's bf16-matmul numerics.
    ref_bf16 = reference_forward_bf16(x, params)
    assert jnp.allclose(out, ref_bf16, atol=2e-2, rtol=2e-2), (
        f"max abs err vs bf16 ref = {jnp.max(jnp.abs(out - ref_bf16))}")
    # Loose check vs the module-faithful f32 reference (with biases): confirms the
    # bias-drop is exact and bounds bf16 quantization error.
    ref_f32 = reference_forward_f32(x, params)
    assert jnp.allclose(out, ref_f32, atol=1.5e-1), (
        f"max abs err vs f32 ref = {jnp.max(jnp.abs(out - ref_f32))}")


if __name__ == "__main__":
    key = jax.random.PRNGKey(0)
    key, kx1, kx2, kp = jax.random.split(key, 4)

    params = init_params(kp)
    kparams = pack_params(params)

    # Sublane-aligned batch (fast path, no masking emitted).
    B1 = 8
    x1 = jax.random.normal(kx1, (B1, D_IN), jnp.float32)
    out1 = jax.block_until_ready(fully_connected_net(x1, kparams))
    assert out1.shape == (B1, D_OUT), out1.shape
    _check(out1, x1, params)

    # Non-multiple-of-8 batch exercises the padded-row masking path.
    B2 = 5
    x2 = jax.random.normal(kx2, (B2, D_IN), jnp.float32)
    out2 = jax.block_until_ready(fully_connected_net(x2, kparams))
    assert out2.shape == (B2, D_OUT), out2.shape
    _check(out2, x2, params)

    print("KERNEL_OK")
</pallas_src>

<mosaic_0001>
module attributes {stable_mosaic.version = 11 : i64} {
  func.func @mlp_kernel(%arg0: memref<8x896xbf16, #tpu.memory_space<vmem>>, %arg1: memref<896x384xbf16, #tpu.memory_space<vmem>>, %arg2: memref<384x128xbf16, #tpu.memory_space<vmem>>, %arg3: memref<128x128xbf16, #tpu.memory_space<vmem>>, %arg4: memref<1x1152xf32, #tpu.memory_space<vmem>>, %arg5: memref<8x128xf32, #tpu.memory_space<vmem>>) attributes {dimension_semantics = [], scalar_prefetch = 0 : i64, scratch_operands = 0 : i64, tpu.core_type = #tpu.core_type<tc>} {
    %c0 = arith.constant 0 : index
    %c0_0 = arith.constant 0 : index
    %0 = vector.load %arg4[%c0, %c0_0] : memref<1x1152xf32, #tpu.memory_space<vmem>>, vector<1x384xf32>
    %c0_1 = arith.constant 0 : index
    %c384 = arith.constant 384 : index
    %1 = vector.load %arg4[%c0_1, %c384] : memref<1x1152xf32, #tpu.memory_space<vmem>>, vector<1x384xf32>
    %c0_2 = arith.constant 0 : index
    %c768 = arith.constant 768 : index
    %2 = vector.load %arg4[%c0_2, %c768] : memref<1x1152xf32, #tpu.memory_space<vmem>>, vector<1x128xf32>
    %c0_3 = arith.constant 0 : index
    %c896 = arith.constant 896 : index
    %3 = vector.load %arg4[%c0_3, %c896] : memref<1x1152xf32, #tpu.memory_space<vmem>>, vector<1x128xf32>
    %c0_4 = arith.constant 0 : index
    %c1024 = arith.constant 1024 : index
    %4 = vector.load %arg4[%c0_4, %c1024] : memref<1x1152xf32, #tpu.memory_space<vmem>>, vector<1x128xf32>
    %c0_5 = arith.constant 0 : index
    %c0_6 = arith.constant 0 : index
    %5 = vector.load %arg0[%c0_5, %c0_6] : memref<8x896xbf16, #tpu.memory_space<vmem>>, vector<8x896xbf16>
    %c0_7 = arith.constant 0 : index
    %c0_8 = arith.constant 0 : index
    %6 = vector.load %arg1[%c0_7, %c0_8] : memref<896x384xbf16, #tpu.memory_space<vmem>>, vector<896x384xbf16>
    %cst = arith.constant dense<0.000000e+00> : vector<8x384xf32>
    %7 = tpu.matmul %5, %6, %cst {dimension_numbers = #tpu.dot_dimension_numbers<[1], [0], [0], [1], [0, 0, 1, 1], [], []>} : vector<8x896xbf16>, vector<896x384xbf16>, vector<8x384xf32> -> vector<8x384xf32>
    %cst_9 = arith.constant dense<0.000000e+00> : vector<384xf32>
    %8 = vector.multi_reduction <add>, %7, %cst_9 [0] : vector<8x384xf32> to vector<384xf32>
    %9 = vector.shape_cast %8 : vector<384xf32> to vector<1x384xf32>
    %10 = arith.mulf %7, %7 : vector<8x384xf32>
    %cst_10 = arith.constant dense<0.000000e+00> : vector<384xf32>
    %11 = vector.multi_reduction <add>, %10, %cst_10 [0] : vector<8x384xf32> to vector<384xf32>
    %12 = vector.shape_cast %11 : vector<384xf32> to vector<1x384xf32>
    %cst_11 = arith.constant 1.250000e-01 : f32
    %13 = vector.broadcast %cst_11 : f32 to vector<1x384xf32>
    %14 = arith.mulf %9, %13 : vector<1x384xf32>
    %cst_12 = arith.constant 1.250000e-01 : f32
    %15 = vector.broadcast %cst_12 : f32 to vector<1x384xf32>
    %16 = arith.mulf %12, %15 : vector<1x384xf32>
    %17 = arith.mulf %14, %14 : vector<1x384xf32>
    %18 = arith.subf %16, %17 : vector<1x384xf32>
    %cst_13 = arith.constant 9.99999974E-6 : f32
    %19 = vector.broadcast %cst_13 : f32 to vector<1x384xf32>
    %20 = arith.addf %18, %19 : vector<1x384xf32>
    %21 = math.rsqrt %20 : vector<1x384xf32>
    %22 = arith.mulf %0, %21 : vector<1x384xf32>
    %23 = arith.mulf %14, %22 : vector<1x384xf32>
    %24 = arith.subf %1, %23 : vector<1x384xf32>
    %25 = vector.broadcast %22 : vector<1x384xf32> to vector<8x384xf32>
    %26 = arith.mulf %7, %25 : vector<8x384xf32>
    %27 = vector.broadcast %24 : vector<1x384xf32> to vector<8x384xf32>
    %28 = arith.addf %26, %27 : vector<8x384xf32>
    %cst_14 = arith.constant 0.000000e+00 : f32
    %29 = vector.broadcast %cst_14 : f32 to vector<8x384xf32>
    %30 = arith.maximumf %28, %29 : vector<8x384xf32>
    %31 = arith.truncf %30 : vector<8x384xf32> to vector<8x384xbf16>
    %c0_15 = arith.constant 0 : index
    %c0_16 = arith.constant 0 : index
    %32 = vector.load %arg2[%c0_15, %c0_16] : memref<384x128xbf16, #tpu.memory_space<vmem>>, vector<384x128xbf16>
    %cst_17 = arith.constant dense<0.000000e+00> : vector<8x128xf32>
    %33 = tpu.matmul %31, %32, %cst_17 {dimension_numbers = #tpu.dot_dimension_numbers<[1], [0], [0], [1], [0, 0, 1, 1], [], []>} : vector<8x384xbf16>, vector<384x128xbf16>, vector<8x128xf32> -> vector<8x128xf32>
    %cst_18 = arith.constant dense<0.000000e+00> : vector<128xf32>
    %34 = vector.multi_reduction <add>, %33, %cst_18 [0] : vector<8x128xf32> to vector<128xf32>
    %35 = vector.shape_cast %34 : vector<128xf32> to vector<1x128xf32>
    %36 = arith.mulf %33, %33 : vector<8x128xf32>
    %cst_19 = arith.constant dense<0.000000e+00> : vector<128xf32>
    %37 = vector.multi_reduction <add>, %36, %cst_19 [0] : vector<8x128xf32> to vector<128xf32>
    %38 = vector.shape_cast %37 : vector<128xf32> to vector<1x128xf32>
    %cst_20 = arith.constant 1.250000e-01 : f32
    %39 = vector.broadcast %cst_20 : f32 to vector<1x128xf32>
    %40 = arith.mulf %35, %39 : vector<1x128xf32>
    %cst_21 = arith.constant 1.250000e-01 : f32
    %41 = vector.broadcast %cst_21 : f32 to vector<1x128xf32>
    %42 = arith.mulf %38, %41 : vector<1x128xf32>
    %43 = arith.mulf %40, %40 : vector<1x128xf32>
    %44 = arith.subf %42, %43 : vector<1x128xf32>
    %cst_22 = arith.constant 9.99999974E-6 : f32
    %45 = vector.broadcast %cst_22 : f32 to vector<1x128xf32>
    %46 = arith.addf %44, %45 : vector<1x128xf32>
    %47 = math.rsqrt %46 : vector<1x128xf32>
    %48 = arith.mulf %2, %47 : vector<1x128xf32>
    %49 = arith.mulf %40, %48 : vector<1x128xf32>
    %50 = arith.subf %3, %49 : vector<1x128xf32>
    %51 = vector.broadcast %48 : vector<1x128xf32> to vector<8x128xf32>
    %52 = arith.mulf %33, %51 : vector<8x128xf32>
    %53 = vector.broadcast %50 : vector<1x128xf32> to vector<8x128xf32>
    %54 = arith.addf %52, %53 : vector<8x128xf32>
    %cst_23 = arith.constant 0.000000e+00 : f32
    %55 = vector.broadcast %cst_23 : f32 to vector<8x128xf32>
    %56 = arith.maximumf %54, %55 : vector<8x128xf32>
    %57 = arith.truncf %56 : vector<8x128xf32> to vector<8x128xbf16>
    %c0_24 = arith.constant 0 : index
    %c0_25 = arith.constant 0 : index
    %58 = vector.load %arg3[%c0_24, %c0_25] : memref<128x128xbf16, #tpu.memory_space<vmem>>, vector<128x128xbf16>
    %cst_26 = arith.constant dense<0.000000e+00> : vector<8x128xf32>
    %59 = tpu.matmul %57, %58, %cst_26 {dimension_numbers = #tpu.dot_dimension_numbers<[1], [0], [0], [1], [0, 0, 1, 1], [], []>} : vector<8x128xbf16>, vector<128x128xbf16>, vector<8x128xf32> -> vector<8x128xf32>
    %60 = vector.broadcast %4 : vector<1x128xf32> to vector<8x128xf32>
    %61 = arith.addf %59, %60 : vector<8x128xf32>
    %c0_27 = arith.constant 0 : index
    %c0_28 = arith.constant 0 : index
    %62 = vector.load %arg5[%c0_27, %c0_28] : memref<8x128xf32, #tpu.memory_space<vmem>>, vector<8x128xf32>
    tpu.vector_store %arg5[%c0_27, %c0_28], %61 {strides = array<i32>} : memref<8x128xf32, #tpu.memory_space<vmem>>, vector<8x128xf32>,
    return
  }
}

</mosaic_0001>

<llo_original>
// kernel: fully_connected_net.1
$region0: #{fully_connected_net.1}
  #allocation0 [shape = 'u32[]', space=smem, size = 0x4, offset = 0x4, fixed_abs, tag = 'smem constant byte address 0x4 - core index']
  #allocation1 [shape = 'u32[144,128]{1,0:T(1,128)}', space=vmem, size = 0x12000, scoped, tag = 'internal scratch']
  %s0 = inlined_call_operand.vmem [shape: bf16[8,896], index: 0, kind: input, shape index: {}]
  %s1 = inlined_call_operand.hbm [shape: bf16[896,384], index: 1, kind: input, shape index: {}]
  %s2 = inlined_call_operand.hbm [shape: bf16[384,128], index: 2, kind: input, shape index: {}]
  %s3 = inlined_call_operand.vmem [shape: bf16[128,128], index: 3, kind: input, shape index: {}]
  %s4 = inlined_call_operand.vmem [shape: f32[1,1152], index: 4, kind: input, shape index: {}]
  %s5 = inlined_call_operand.hbm [shape: f32[8,128], index: 5, kind: output, shape index: {}]
  %s6 = sld [smem:[#allocation0]]
  $region38: #{fully_connected_net.1} parent=0
    _
  %s8 = ssub.s32 1, %s6
  %s9 = scalar_select 0, %s8, %s6
  $region1: #{fully_connected_net.1} parent=0
    #allocation2 [shape = 'u8[688128]{0}', space=vmem, size = 0xa8000, scoped, tag = 'input window, operand 1, single buffered']
    #allocation3 [shape = 's32[1]{0}', space=sflag, size = 0x4, scoped, tag = 'scoped memory for fully_connected_net.1']
    #allocation4 [shape = 's32[1]{0}', space=sflag, size = 0x4, scoped, tag = 'scoped memory for fully_connected_net.1']
    #allocation5 [shape = 'u8[98304]{0}', space=vmem, size = 0x18000, scoped, tag = 'input window, operand 2, single buffered']
    #allocation6 [shape = 's32[1]{0}', space=sflag, size = 0x4, scoped, tag = 'scoped memory for fully_connected_net.1']
    #allocation7 [shape = 'u8[4096]{0}', space=vmem, size = 0x1000, scoped, tag = 'output window, operand 0, single buffered']
    %10 = vsyncpa [#allocation3], 0
    %11 = vsyncpa [#allocation6], 0
    %12 = vsyncpa [#allocation4], 0
    // Predicated region
    $region2: #{fully_connected_net.1} parent=1 // pred_check
      _
    $region3: #{fully_connected_net.1} parent=1 // pred_check_branch
      %14 = sbr.rel (0) target = $region5
    $region4: #{fully_connected_net.1} parent=1 // pred_region
      _
    $region5: #{fully_connected_net.1} parent=1 // pred_fallthru
      _
    // Predicated region
    $region6: #{fully_connected_net.1} parent=1 // pred_check
      _
    $region7: #{fully_connected_net.1} parent=1 // pred_check_branch
      %16 = sbr.rel (0) target = $region9
    $region8: #{fully_connected_net.1} parent=1 // pred_region
      %s18 = ssub.s32 21504, 21504
      %19 = vsyncadd [#allocation3], %s18
      %s20 = sshll.u32 [#allocation2], 4
      %s21 = int_to_ptr.vmem [resolvable:$true] %s20
      %26 = dma.hbm_to_vmem [thread:$0]  %s1, 21504, %s21, [#allocation3], 192, 192, 12
    $region9: #{fully_connected_net.1} parent=1 // pred_fallthru
      _
    // Predicated region
    $region10: #{fully_connected_net.1} parent=1 // pred_check
      _
    $region11: #{fully_connected_net.1} parent=1 // pred_check_branch
      %28 = sbr.rel (0) target = $region13
    $region12: #{fully_connected_net.1} parent=1 // pred_region
      %s30 = ssub.s32 3072, 3072
      %31 = vsyncadd [#allocation6], %s30
      %s32 = sshll.u32 [#allocation5], 4
      %s33 = int_to_ptr.vmem [resolvable:$true] %s32
      %38 = dma.hbm_to_vmem [thread:$0]  %s2, 3072, %s33, [#allocation6], 64, 64, 4
    $region13: #{fully_connected_net.1} parent=1 // pred_fallthru
      _
    // Predicated region
    $region14: #{fully_connected_net.1} parent=1 // pred_check
      _
    $region15: #{fully_connected_net.1} parent=1 // pred_check_branch
      %40 = sbr.rel (0) target = $region17
    $region16: #{fully_connected_net.1} parent=1 // pred_region
      _
    $region17: #{fully_connected_net.1} parent=1 // pred_fallthru
      _
    // Predicated region
    $region18: #{fully_connected_net.1} parent=1 // pred_check
      _
    $region19: #{fully_connected_net.1} parent=1 // pred_check_branch
      %42 = sbr.rel (0) target = $region21
    $region20: #{fully_connected_net.1} parent=1 // pred_region
      _
    $region21: #{fully_connected_net.1} parent=1 // pred_fallthru
      _
    // Predicated region
    $region22: #{fully_connected_net.1} parent=1 // pred_check
      _
    $region23: #{fully_connected_net.1} parent=1 // pred_check_branch
      %44 = sbr.rel (0) target = $region25
    $region24: #{fully_connected_net.1} parent=1 // pred_region
      %45 = dma.done [#allocation3], 21504
    $region25: #{fully_connected_net.1} parent=1 // pred_fallthru
      _
    // Predicated region
    $region26: #{fully_connected_net.1} parent=1 // pred_check
      _
    $region27: #{fully_connected_net.1} parent=1 // pred_check_branch
      %47 = sbr.rel (0) target = $region29
    $region28: #{fully_connected_net.1} parent=1 // pred_region
      %48 = dma.done [#allocation6], 3072
    $region29: #{fully_connected_net.1} parent=1 // pred_fallthru
      _
    %v50 = vld [vmem:[%s4] sm:$0x7]
    %v51 = vld [vmem:[%s4 + $0x3] sm:$0x7]
    %v52 = vld [vmem:[%s4 + $0x6] sm:$0x1]
    %v53 = vld [vmem:[%s4 + $0x7] sm:$0x1]
    %v54 = vld [vmem:[%s4 + $0x8] sm:$0x1]
    %v55 = vld [vmem:[%s0] sm:$0xff]
    %v56 = vld [vmem:[%s0 + $0x8] sm:$0xff]
    %v57 = vld [vmem:[%s0 + $0x10] sm:$0xff]
    %v58 = vld [vmem:[%s0 + $0x18] sm:$0xf]
    %v59 = vld [vmem:[#allocation2] sm:$0xff]
    %v60 = vld [vmem:[#allocation2 + $0x8] sm:$0xf]
    %v61 = vld [vmem:[#allocation2 + $0xc] sm:$0xff]
    %v62 = vld [vmem:[#allocation2 + $0x14] sm:$0xf]
    %v63 = vld [vmem:[#allocation2 + $0x18] sm:$0xff]
    %v64 = vld [vmem:[#allocation2 + $0x20] sm:$0xf]
    %v65 = vld [vmem:[#allocation2 + $0x24] sm:$0xff]
    %v66 = vld [vmem:[#allocation2 + $0x2c] sm:$0xf]
    %v67 = vld [vmem:[#allocation2 + $0x30] sm:$0xff]
    %v68 = vld [vmem:[#allocation2 + $0x38] sm:$0xf]
    %v69 = vld [vmem:[#allocation2 + $0x3c] sm:$0xff]
    %v70 = vld [vmem:[#allocation2 + $0x44] sm:$0xf]
    %v71 = vld [vmem:[#allocation2 + $0x48] sm:$0xff]
    %v72 = vld [vmem:[#allocation2 + $0x50] sm:$0xf]
    %v73 = vld [vmem:[#allocation2 + $0x54] sm:$0xff]
    %v74 = vld [vmem:[#allocation2 + $0x5c] sm:$0xf]
    %v75 = vld [vmem:[#allocation2 + $0x60] sm:$0xff]
    %v76 = vld [vmem:[#allocation2 + $0x68] sm:$0xf]
    %v77 = vld [vmem:[#allocation2 + $0x6c] sm:$0xff]
    %v78 = vld [vmem:[#allocation2 + $0x74] sm:$0xf]
    %v79 = vld [vmem:[#allocation2 + $0x78] sm:$0xff]
    %v80 = vld [vmem:[#allocation2 + $0x80] sm:$0xf]
    %v81 = vld [vmem:[#allocation2 + $0x84] sm:$0xff]
    %v82 = vld [vmem:[#allocation2 + $0x8c] sm:$0xf]
    %v83 = vld [vmem:[#allocation2 + $0x90] sm:$0xff]
    %v84 = vld [vmem:[#allocation2 + $0x98] sm:$0xf]
    %v85 = vld [vmem:[#allocation2 + $0x9c] sm:$0xff]
    %v86 = vld [vmem:[#allocation2 + $0xa4] sm:$0xf]
    %v87 = vld [vmem:[#allocation2 + $0xa8] sm:$0xff]
    %v88 = vld [vmem:[#allocation2 + $0xb0] sm:$0xf]
    %v89 = vld [vmem:[#allocation2 + $0xb4] sm:$0xff]
    %v90 = vld [vmem:[#allocation2 + $0xbc] sm:$0xf]
    %v91 = vld [vmem:[#allocation2 + $0xc0] sm:$0xff]
    %v92 = vld [vmem:[#allocation2 + $0xc8] sm:$0xf]
    %v93 = vld [vmem:[#allocation2 + $0xcc] sm:$0xff]
    %v94 = vld [vmem:[#allocation2 + $0xd4] sm:$0xf]
    %v95 = vld [vmem:[#allocation2 + $0xd8] sm:$0xff]
    %v96 = vld [vmem:[#allocation2 + $0xe0] sm:$0xf]
    %v97 = vld [vmem:[#allocation2 + $0xe4] sm:$0xff]
    %v98 = vld [vmem:[#allocation2 + $0xec] sm:$0xf]
    %v99 = vld [vmem:[#allocation2 + $0xf0] sm:$0xff]
    %v100 = vld [vmem:[#allocation2 + $0xf8] sm:$0xf]
    %v101 = vld [vmem:[#allocation2 + $0xfc] sm:$0xff]
    %v102 = vld [vmem:[#allocation2 + $0x104] sm:$0xf]
    %v103 = vld [vmem:[#allocation2 + $0x108] sm:$0xff]
    %v104 = vld [vmem:[#allocation2 + $0x110] sm:$0xf]
    %v105 = vld [vmem:[#allocation2 + $0x114] sm:$0xff]
    %v106 = vld [vmem:[#allocation2 + $0x11c] sm:$0xf]
    %v107 = vld [vmem:[#allocation2 + $0x120] sm:$0xff]
    %v108 = vld [vmem:[#allocation2 + $0x128] sm:$0xf]
    %v109 = vld [vmem:[#allocation2 + $0x12c] sm:$0xff]
    %v110 = vld [vmem:[#allocation2 + $0x134] sm:$0xf]
    %v111 = vld [vmem:[#allocation2 + $0x138] sm:$0xff]
    %v112 = vld [vmem:[#allocation2 + $0x140] sm:$0xf]
    %v113 = vld [vmem:[#allocation2 + $0x144] sm:$0xff]
    %v114 = vld [vmem:[#allocation2 + $0x14c] sm:$0xf]
    %v115 = vld [vmem:[#allocation2 + $0x150] sm:$0xff]
    %v116 = vld [vmem:[#allocation2 + $0x158] sm:$0xf]
    %v117 = vld [vmem:[#allocation2 + $0x15c] sm:$0xff]
    %v118 = vld [vmem:[#allocation2 + $0x164] sm:$0xf]
    %v119 = vld [vmem:[#allocation2 + $0x168] sm:$0xff]
    %v120 = vld [vmem:[#allocation2 + $0x170] sm:$0xf]
    %v121 = vld [vmem:[#allocation2 + $0x174] sm:$0xff]
    %v122 = vld [vmem:[#allocation2 + $0x17c] sm:$0xf]
    %v123 = vld [vmem:[#allocation2 + $0x180] sm:$0xff]
    %v124 = vld [vmem:[#allocation2 + $0x188] sm:$0xf]
    %v125 = vld [vmem:[#allocation2 + $0x18c] sm:$0xff]
    %v126 = vld [vmem:[#allocation2 + $0x194] sm:$0xf]
    %v127 = vld [vmem:[#allocation2 + $0x198] sm:$0xff]
    %v128 = vld [vmem:[#allocation2 + $0x1a0] sm:$0xf]
    %v129 = vld [vmem:[#allocation2 + $0x1a4] sm:$0xff]
    %v130 = vld [vmem:[#allocation2 + $0x1ac] sm:$0xf]
    %v131 = vld [vmem:[#allocation2 + $0x1b0] sm:$0xff]
    %v132 = vld [vmem:[#allocation2 + $0x1b8] sm:$0xf]
    %v133 = vld [vmem:[#allocation2 + $0x1bc] sm:$0xff]
    %v134 = vld [vmem:[#allocation2 + $0x1c4] sm:$0xf]
    %v135 = vld [vmem:[#allocation2 + $0x1c8] sm:$0xff]
    %v136 = vld [vmem:[#allocation2 + $0x1d0] sm:$0xf]
    %v137 = vld [vmem:[#allocation2 + $0x1d4] sm:$0xff]
    %v138 = vld [vmem:[#allocation2 + $0x1dc] sm:$0xf]
    %v139 = vld [vmem:[#allocation2 + $0x1e0] sm:$0xff]
    %v140 = vld [vmem:[#allocation2 + $0x1e8] sm:$0xf]
    %v141 = vld [vmem:[#allocation2 + $0x1ec] sm:$0xff]
    %v142 = vld [vmem:[#allocation2 + $0x1f4] sm:$0xf]
    %v143 = vld [vmem:[#allocation2 + $0x1f8] sm:$0xff]
    %v144 = vld [vmem:[#allocation2 + $0x200] sm:$0xf]
    %v145 = vld [vmem:[#allocation2 + $0x204] sm:$0xff]
    %v146 = vld [vmem:[#allocation2 + $0x20c] sm:$0xf]
    %v147 = vld [vmem:[#allocation2 + $0x210] sm:$0xff]
    %v148 = vld [vmem:[#allocation2 + $0x218] sm:$0xf]
    %v149 = vld [vmem:[#allocation2 + $0x21c] sm:$0xff]
    %v150 = vld [vmem:[#allocation2 + $0x224] sm:$0xf]
    %v151 = vld [vmem:[#allocation2 + $0x228] sm:$0xff]
    %v152 = vld [vmem:[#allocation2 + $0x230] sm:$0xf]
    %v153 = vld [vmem:[#allocation2 + $0x234] sm:$0xff]
    %v154 = vld [vmem:[#allocation2 + $0x23c] sm:$0xf]
    %v155 = vld [vmem:[#allocation2 + $0x240] sm:$0xff]
    %v156 = vld [vmem:[#allocation2 + $0x248] sm:$0xf]
    %v157 = vld [vmem:[#allocation2 + $0x24c] sm:$0xff]
    %v158 = vld [vmem:[#allocation2 + $0x254] sm:$0xf]
    %v159 = vld [vmem:[#allocation2 + $0x258] sm:$0xff]
    %v160 = vld [vmem:[#allocation2 + $0x260] sm:$0xf]
    %v161 = vld [vmem:[#allocation2 + $0x264] sm:$0xff]
    %v162 = vld [vmem:[#allocation2 + $0x26c] sm:$0xf]
    %v163 = vld [vmem:[#allocation2 + $0x270] sm:$0xff]
    %v164 = vld [vmem:[#allocation2 + $0x278] sm:$0xf]
    %v165 = vld [vmem:[#allocation2 + $0x27c] sm:$0xff]
    %v166 = vld [vmem:[#allocation2 + $0x284] sm:$0xf]
    %v167 = vld [vmem:[#allocation2 + $0x288] sm:$0xff]
    %v168 = vld [vmem:[#allocation2 + $0x290] sm:$0xf]
    %v169 = vld [vmem:[#allocation2 + $0x294] sm:$0xff]
    %v170 = vld [vmem:[#allocation2 + $0x29c] sm:$0xf]
    %v171 = vld [vmem:[#allocation2 + $0x2a0] sm:$0xff]
    %v172 = vld [vmem:[#allocation2 + $0x2a8] sm:$0xf]
    %v173 = vld [vmem:[#allocation2 + $0x2ac] sm:$0xff]
    %v174 = vld [vmem:[#allocation2 + $0x2b4] sm:$0xf]
    %v175 = vld [vmem:[#allocation2 + $0x2b8] sm:$0xff]
    %v176 = vld [vmem:[#allocation2 + $0x2c0] sm:$0xf]
    %v177 = vld [vmem:[#allocation2 + $0x2c4] sm:$0xff]
    %v178 = vld [vmem:[#allocation2 + $0x2cc] sm:$0xf]
    %v179 = vld [vmem:[#allocation2 + $0x2d0] sm:$0xff]
    %v180 = vld [vmem:[#allocation2 + $0x2d8] sm:$0xf]
    %v181 = vld [vmem:[#allocation2 + $0x2dc] sm:$0xff]
    %v182 = vld [vmem:[#allocation2 + $0x2e4] sm:$0xf]
    %v183 = vld [vmem:[#allocation2 + $0x2e8] sm:$0xff]
    %v184 = vld [vmem:[#allocation2 + $0x2f0] sm:$0xf]
    %v185 = vld [vmem:[#allocation2 + $0x2f4] sm:$0xff]
    %v186 = vld [vmem:[#allocation2 + $0x2fc] sm:$0xf]
    %v187 = vld [vmem:[#allocation2 + $0x300] sm:$0xff]
    %v188 = vld [vmem:[#allocation2 + $0x308] sm:$0xf]
    %v189 = vld [vmem:[#allocation2 + $0x30c] sm:$0xff]
    %v190 = vld [vmem:[#allocation2 + $0x314] sm:$0xf]
    %v191 = vld [vmem:[#allocation2 + $0x318] sm:$0xff]
    %v192 = vld [vmem:[#allocation2 + $0x320] sm:$0xf]
    %v193 = vld [vmem:[#allocation2 + $0x324] sm:$0xff]
    %v194 = vld [vmem:[#allocation2 + $0x32c] sm:$0xf]
    %v195 = vld [vmem:[#allocation2 + $0x330] sm:$0xff]
    %v196 = vld [vmem:[#allocation2 + $0x338] sm:$0xf]
    %v197 = vld [vmem:[#allocation2 + $0x33c] sm:$0xff]
    %v198 = vld [vmem:[#allocation2 + $0x344] sm:$0xf]
    %v199 = vld [vmem:[#allocation2 + $0x348] sm:$0xff]
    %v200 = vld [vmem:[#allocation2 + $0x350] sm:$0xf]
    %v201 = vld [vmem:[#allocation2 + $0x354] sm:$0xff]
    %v202 = vld [vmem:[#allocation2 + $0x35c] sm:$0xf]
    %v203 = vld [vmem:[#allocation2 + $0x360] sm:$0xff]
    %v204 = vld [vmem:[#allocation2 + $0x368] sm:$0xf]
    %v205 = vld [vmem:[#allocation2 + $0x36c] sm:$0xff]
    %v206 = vld [vmem:[#allocation2 + $0x374] sm:$0xf]
    %v207 = vld [vmem:[#allocation2 + $0x378] sm:$0xff]
    %v208 = vld [vmem:[#allocation2 + $0x380] sm:$0xf]
    %v209 = vld [vmem:[#allocation2 + $0x384] sm:$0xff]
    %v210 = vld [vmem:[#allocation2 + $0x38c] sm:$0xf]
    %v211 = vld [vmem:[#allocation2 + $0x390] sm:$0xff]
    %v212 = vld [vmem:[#allocation2 + $0x398] sm:$0xf]
    %v213 = vld [vmem:[#allocation2 + $0x39c] sm:$0xff]
    %v214 = vld [vmem:[#allocation2 + $0x3a4] sm:$0xf]
    %v215 = vld [vmem:[#allocation2 + $0x3a8] sm:$0xff]
    %v216 = vld [vmem:[#allocation2 + $0x3b0] sm:$0xf]
    %v217 = vld [vmem:[#allocation2 + $0x3b4] sm:$0xff]
    %v218 = vld [vmem:[#allocation2 + $0x3bc] sm:$0xf]
    %v219 = vld [vmem:[#allocation2 + $0x3c0] sm:$0xff]
    %v220 = vld [vmem:[#allocation2 + $0x3c8] sm:$0xf]
    %v221 = vld [vmem:[#allocation2 + $0x3cc] sm:$0xff]
    %v222 = vld [vmem:[#allocation2 + $0x3d4] sm:$0xf]
    %v223 = vld [vmem:[#allocation2 + $0x3d8] sm:$0xff]
    %v224 = vld [vmem:[#allocation2 + $0x3e0] sm:$0xf]
    %v225 = vld [vmem:[#allocation2 + $0x3e4] sm:$0xff]
    %v226 = vld [vmem:[#allocation2 + $0x3ec] sm:$0xf]
    %v227 = vld [vmem:[#allocation2 + $0x3f0] sm:$0xff]
    %v228 = vld [vmem:[#allocation2 + $0x3f8] sm:$0xf]
    %v229 = vld [vmem:[#allocation2 + $0x3fc] sm:$0xff]
    %v230 = vld [vmem:[#allocation2 + $0x404] sm:$0xf]
    %v231 = vld [vmem:[#allocation2 + $0x408] sm:$0xff]
    %v232 = vld [vmem:[#allocation2 + $0x410] sm:$0xf]
    %v233 = vld [vmem:[#allocation2 + $0x414] sm:$0xff]
    %v234 = vld [vmem:[#allocation2 + $0x41c] sm:$0xf]
    %v235 = vld [vmem:[#allocation2 + $0x420] sm:$0xff]
    %v236 = vld [vmem:[#allocation2 + $0x428] sm:$0xf]
    %v237 = vld [vmem:[#allocation2 + $0x42c] sm:$0xff]
    %v238 = vld [vmem:[#allocation2 + $0x434] sm:$0xf]
    %v239 = vld [vmem:[#allocation2 + $0x438] sm:$0xff]
    %v240 = vld [vmem:[#allocation2 + $0x440] sm:$0xf]
    %v241 = vld [vmem:[#allocation2 + $0x444] sm:$0xff]
    %v242 = vld [vmem:[#allocation2 + $0x44c] sm:$0xf]
    %v243 = vld [vmem:[#allocation2 + $0x450] sm:$0xff]
    %v244 = vld [vmem:[#allocation2 + $0x458] sm:$0xf]
    %v245 = vld [vmem:[#allocation2 + $0x45c] sm:$0xff]
    %v246 = vld [vmem:[#allocation2 + $0x464] sm:$0xf]
    %v247 = vld [vmem:[#allocation2 + $0x468] sm:$0xff]
    %v248 = vld [vmem:[#allocation2 + $0x470] sm:$0xf]
    %v249 = vld [vmem:[#allocation2 + $0x474] sm:$0xff]
    %v250 = vld [vmem:[#allocation2 + $0x47c] sm:$0xf]
    %v251 = vld [vmem:[#allocation2 + $0x480] sm:$0xff]
    %v252 = vld [vmem:[#allocation2 + $0x488] sm:$0xf]
    %v253 = vld [vmem:[#allocation2 + $0x48c] sm:$0xff]
    %v254 = vld [vmem:[#allocation2 + $0x494] sm:$0xf]
    %v255 = vld [vmem:[#allocation2 + $0x498] sm:$0xff]
    %v256 = vld [vmem:[#allocation2 + $0x4a0] sm:$0xf]
    %v257 = vld [vmem:[#allocation2 + $0x4a4] sm:$0xff]
    %v258 = vld [vmem:[#allocation2 + $0x4ac] sm:$0xf]
    %v259 = vld [vmem:[#allocation2 + $0x4b0] sm:$0xff]
    %v260 = vld [vmem:[#allocation2 + $0x4b8] sm:$0xf]
    %v261 = vld [vmem:[#allocation2 + $0x4bc] sm:$0xff]
    %v262 = vld [vmem:[#allocation2 + $0x4c4] sm:$0xf]
    %v263 = vld [vmem:[#allocation2 + $0x4c8] sm:$0xff]
    %v264 = vld [vmem:[#allocation2 + $0x4d0] sm:$0xf]
    %v265 = vld [vmem:[#allocation2 + $0x4d4] sm:$0xff]
    %v266 = vld [vmem:[#allocation2 + $0x4dc] sm:$0xf]
    %v267 = vld [vmem:[#allocation2 + $0x4e0] sm:$0xff]
    %v268 = vld [vmem:[#allocation2 + $0x4e8] sm:$0xf]
    %v269 = vld [vmem:[#allocation2 + $0x4ec] sm:$0xff]
    %v270 = vld [vmem:[#allocation2 + $0x4f4] sm:$0xf]
    %v271 = vld [vmem:[#allocation2 + $0x4f8] sm:$0xff]
    %v272 = vld [vmem:[#allocation2 + $0x500] sm:$0xf]
    %v273 = vld [vmem:[#allocation2 + $0x504] sm:$0xff]
    %v274 = vld [vmem:[#allocation2 + $0x50c] sm:$0xf]
    %v275 = vld [vmem:[#allocation2 + $0x510] sm:$0xff]
    %v276 = vld [vmem:[#allocation2 + $0x518] sm:$0xf]
    %v277 = vld [vmem:[#allocation2 + $0x51c] sm:$0xff]
    %v278 = vld [vmem:[#allocation2 + $0x524] sm:$0xf]
    %v279 = vld [vmem:[#allocation2 + $0x528] sm:$0xff]
    %v280 = vld [vmem:[#allocation2 + $0x530] sm:$0xf]
    %v281 = vld [vmem:[#allocation2 + $0x534] sm:$0xff]
    %v282 = vld [vmem:[#allocation2 + $0x53c] sm:$0xf]
    %v287 = vunpack.c.l.b16 %v55
    %v288 = vunpack.c.h.b16 %v55
    %v289 = vunpack.c.l.b16 %v56
    %v290 = vunpack.c.h.b16 %v56
    %v291 = vunpack.c.l.b16 %v57
    %v292 = vunpack.c.h.b16 %v57
    %v293 = vunpack.c.l.b16 %v58
    %v294 = vpack.c.b16 %v287, %v287
    %v295 = vpack.c.b16 %v288, %v288
    %v296 = vpack.c.b16 %v289, %v289
    %v297 = vpack.c.b16 %v290, %v290
    %v298 = vpack.c.b16 %v291, %v291
    %v299 = vpack.c.b16 %v292, %v292
    %v300 = vpack.c.b16 %v293, %v293
    %v532 = vunpack.c.l.b16 %v59
    %v533 = vunpack.c.h.b16 %v59
    %v534 = vunpack.c.l.b16 %v60
    %v535 = vunpack.c.l.b16 %v61
    %v536 = vunpack.c.h.b16 %v61
    %v537 = vunpack.c.l.b16 %v62
    %v538 = vunpack.c.l.b16 %v63
    %v539 = vunpack.c.h.b16 %v63
    %v540 = vunpack.c.l.b16 %v64
    %v541 = vunpack.c.l.b16 %v65
    %v542 = vunpack.c.h.b16 %v65
    %v543 = vunpack.c.l.b16 %v66
    %v544 = vunpack.c.l.b16 %v67
    %v545 = vunpack.c.h.b16 %v67
    %v546 = vunpack.c.l.b16 %v68
    %v547 = vunpack.c.l.b16 %v69
    %v548 = vunpack.c.h.b16 %v69
    %v549 = vunpack.c.l.b16 %v70
    %v550 = vunpack.c.l.b16 %v71
    %v551 = vunpack.c.h.b16 %v71
    %v552 = vunpack.c.l.b16 %v72
    %v553 = vunpack.c.l.b16 %v73
    %v554 = vunpack.c.h.b16 %v73
    %v555 = vunpack.c.l.b16 %v74
    %v556 = vunpack.c.l.b16 %v75
    %v557 = vunpack.c.h.b16 %v75
    %v558 = vunpack.c.l.b16 %v76
    %v559 = vunpack.c.l.b16 %v77
    %v560 = vunpack.c.h.b16 %v77
    %v561 = vunpack.c.l.b16 %v78
    %v562 = vunpack.c.l.b16 %v79
    %v563 = vunpack.c.h.b16 %v79
    %v564 = vunpack.c.l.b16 %v80
    %v565 = vunpack.c.l.b16 %v81
    %v566 = vunpack.c.h.b16 %v81
    %v567 = vunpack.c.l.b16 %v82
    %v568 = vunpack.c.l.b16 %v83
    %v569 = vunpack.c.h.b16 %v83
    %v570 = vunpack.c.l.b16 %v84
    %v571 = vunpack.c.l.b16 %v85
    %v572 = vunpack.c.h.b16 %v85
    %v573 = vunpack.c.l.b16 %v86
    %v574 = vunpack.c.l.b16 %v87
    %v575 = vunpack.c.h.b16 %v87
    %v576 = vunpack.c.l.b16 %v88
    %v577 = vunpack.c.l.b16 %v89
    %v578 = vunpack.c.h.b16 %v89
    %v579 = vunpack.c.l.b16 %v90
    %v580 = vunpack.c.l.b16 %v91
    %v581 = vunpack.c.h.b16 %v91
    %v582 = vunpack.c.l.b16 %v92
    %v583 = vunpack.c.l.b16 %v93
    %v584 = vunpack.c.h.b16 %v93
    %v585 = vunpack.c.l.b16 %v94
    %v586 = vunpack.c.l.b16 %v95
    %v587 = vunpack.c.h.b16 %v95
    %v588 = vunpack.c.l.b16 %v96
    %v589 = vunpack.c.l.b16 %v97
    %v590 = vunpack.c.h.b16 %v97
    %v591 = vunpack.c.l.b16 %v98
    %v592 = vunpack.c.l.b16 %v99
    %v593 = vunpack.c.h.b16 %v99
    %v594 = vunpack.c.l.b16 %v100
    %v595 = vunpack.c.l.b16 %v101
    %v596 = vunpack.c.h.b16 %v101
    %v597 = vunpack.c.l.b16 %v102
    %v598 = vunpack.c.l.b16 %v103
    %v599 = vunpack.c.h.b16 %v103
    %v600 = vunpack.c.l.b16 %v104
    %v601 = vunpack.c.l.b16 %v105
    %v602 = vunpack.c.h.b16 %v105
    %v603 = vunpack.c.l.b16 %v106
    %v604 = vunpack.c.l.b16 %v107
    %v605 = vunpack.c.h.b16 %v107
    %v606 = vunpack.c.l.b16 %v108
    %v607 = vunpack.c.l.b16 %v109
    %v608 = vunpack.c.h.b16 %v109
    %v609 = vunpack.c.l.b16 %v110
    %v610 = vunpack.c.l.b16 %v111
    %v611 = vunpack.c.h.b16 %v111
    %v612 = vunpack.c.l.b16 %v112
    %v613 = vunpack.c.l.b16 %v113
    %v614 = vunpack.c.h.b16 %v113
    %v615 = vunpack.c.l.b16 %v114
    %v616 = vunpack.c.l.b16 %v115
    %v617 = vunpack.c.h.b16 %v115
    %v618 = vunpack.c.l.b16 %v116
    %v619 = vunpack.c.l.b16 %v117
    %v620 = vunpack.c.h.b16 %v117
    %v621 = vunpack.c.l.b16 %v118
    %v622 = vunpack.c.l.b16 %v119
    %v623 = vunpack.c.h.b16 %v119
    %v624 = vunpack.c.l.b16 %v120
    %v625 = vunpack.c.l.b16 %v121
    %v626 = vunpack.c.h.b16 %v121
    %v627 = vunpack.c.l.b16 %v122
    %v628 = vunpack.c.l.b16 %v123
    %v629 = vunpack.c.h.b16 %v123
    %v630 = vunpack.c.l.b16 %v124
    %v631 = vunpack.c.l.b16 %v125
    %v632 = vunpack.c.h.b16 %v125
    %v633 = vunpack.c.l.b16 %v126
    %v634 = vunpack.c.l.b16 %v127
    %v635 = vunpack.c.h.b16 %v127
    %v636 = vunpack.c.l.b16 %v128
    %v637 = vunpack.c.l.b16 %v129
    %v638 = vunpack.c.h.b16 %v129
    %v639 = vunpack.c.l.b16 %v130
    %v640 = vunpack.c.l.b16 %v131
    %v641 = vunpack.c.h.b16 %v131
    %v642 = vunpack.c.l.b16 %v132
    %v643 = vunpack.c.l.b16 %v133
    %v644 = vunpack.c.h.b16 %v133
    %v645 = vunpack.c.l.b16 %v134
    %v646 = vunpack.c.l.b16 %v135
    %v647 = vunpack.c.h.b16 %v135
    %v648 = vunpack.c.l.b16 %v136
    %v649 = vunpack.c.l.b16 %v137
    %v650 = vunpack.c.h.b16 %v137
    %v651 = vunpack.c.l.b16 %v138
    %v652 = vunpack.c.l.b16 %v139
    %v653 = vunpack.c.h.b16 %v139
    %v654 = vunpack.c.l.b16 %v140
    %v655 = vunpack.c.l.b16 %v141
    %v656 = vunpack.c.h.b16 %v141
    %v657 = vunpack.c.l.b16 %v142
    %v658 = vunpack.c.l.b16 %v143
    %v659 = vunpack.c.h.b16 %v143
    %v660 = vunpack.c.l.b16 %v144
    %v661 = vunpack.c.l.b16 %v145
    %v662 = vunpack.c.h.b16 %v145
    %v663 = vunpack.c.l.b16 %v146
    %v664 = vunpack.c.l.b16 %v147
    %v665 = vunpack.c.h.b16 %v147
    %v666 = vunpack.c.l.b16 %v148
    %v667 = vunpack.c.l.b16 %v149
    %v668 = vunpack.c.h.b16 %v149
    %v669 = vunpack.c.l.b16 %v150
    %v670 = vunpack.c.l.b16 %v151
    %v671 = vunpack.c.h.b16 %v151
    %v672 = vunpack.c.l.b16 %v152
    %v673 = vunpack.c.l.b16 %v153
    %v674 = vunpack.c.h.b16 %v153
    %v675 = vunpack.c.l.b16 %v154
    %v676 = vunpack.c.l.b16 %v155
    %v677 = vunpack.c.h.b16 %v155
    %v678 = vunpack.c.l.b16 %v156
    %v679 = vunpack.c.l.b16 %v157
    %v680 = vunpack.c.h.b16 %v157
    %v681 = vunpack.c.l.b16 %v158
    %v682 = vunpack.c.l.b16 %v159
    %v683 = vunpack.c.h.b16 %v159
    %v684 = vunpack.c.l.b16 %v160
    %v685 = vunpack.c.l.b16 %v161
    %v686 = vunpack.c.h.b16 %v161
    %v687 = vunpack.c.l.b16 %v162
    %v688 = vunpack.c.l.b16 %v163
    %v689 = vunpack.c.h.b16 %v163
    %v690 = vunpack.c.l.b16 %v164
    %v691 = vunpack.c.l.b16 %v165
    %v692 = vunpack.c.h.b16 %v165
    %v693 = vunpack.c.l.b16 %v166
    %v694 = vunpack.c.l.b16 %v167
    %v695 = vunpack.c.h.b16 %v167
    %v696 = vunpack.c.l.b16 %v168
    %v697 = vunpack.c.l.b16 %v169
    %v698 = vunpack.c.h.b16 %v169
    %v699 = vunpack.c.l.b16 %v170
    %v700 = vunpack.c.l.b16 %v171
    %v701 = vunpack.c.h.b16 %v171
    %v702 = vunpack.c.l.b16 %v172
    %v703 = vunpack.c.l.b16 %v173
    %v704 = vunpack.c.h.b16 %v173
    %v705 = vunpack.c.l.b16 %v174
    %v706 = vunpack.c.l.b16 %v175
    %v707 = vunpack.c.h.b16 %v175
    %v708 = vunpack.c.l.b16 %v176
    %v709 = vunpack.c.l.b16 %v177
    %v710 = vunpack.c.h.b16 %v177
    %v711 = vunpack.c.l.b16 %v178
    %v712 = vunpack.c.l.b16 %v179
    %v713 = vunpack.c.h.b16 %v179
    %v714 = vunpack.c.l.b16 %v180
    %v715 = vunpack.c.l.b16 %v181
    %v716 = vunpack.c.h.b16 %v181
    %v717 = vunpack.c.l.b16 %v182
    %v718 = vunpack.c.l.b16 %v183
    %v719 = vunpack.c.h.b16 %v183
    %v720 = vunpack.c.l.b16 %v184
    %v721 = vunpack.c.l.b16 %v185
    %v722 = vunpack.c.h.b16 %v185
    %v723 = vunpack.c.l.b16 %v186
    %v724 = vunpack.c.l.b16 %v187
    %v725 = vunpack.c.h.b16 %v187
    %v726 = vunpack.c.l.b16 %v188
    %v727 = vunpack.c.l.b16 %v189
    %v728 = vunpack.c.h.b16 %v189
    %v729 = vunpack.c.l.b16 %v190
    %v730 = vunpack.c.l.b16 %v191
    %v731 = vunpack.c.h.b16 %v191
    %v732 = vunpack.c.l.b16 %v192
    %v733 = vunpack.c.l.b16 %v193
    %v734 = vunpack.c.h.b16 %v193
    %v735 = vunpack.c.l.b16 %v194
    %v736 = vunpack.c.l.b16 %v195
    %v737 = vunpack.c.h.b16 %v195
    %v738 = vunpack.c.l.b16 %v196
    %v739 = vunpack.c.l.b16 %v197
    %v740 = vunpack.c.h.b16 %v197
    %v741 = vunpack.c.l.b16 %v198
    %v742 = vunpack.c.l.b16 %v199
    %v743 = vunpack.c.h.b16 %v199
    %v744 = vunpack.c.l.b16 %v200
    %v745 = vunpack.c.l.b16 %v201
    %v746 = vunpack.c.h.b16 %v201
    %v747 = vunpack.c.l.b16 %v202
    %v748 = vunpack.c.l.b16 %v203
    %v749 = vunpack.c.h.b16 %v203
    %v750 = vunpack.c.l.b16 %v204
    %v751 = vunpack.c.l.b16 %v205
    %v752 = vunpack.c.h.b16 %v205
    %v753 = vunpack.c.l.b16 %v206
    %v754 = vunpack.c.l.b16 %v207
    %v755 = vunpack.c.h.b16 %v207
    %v756 = vunpack.c.l.b16 %v208
    %v757 = vunpack.c.l.b16 %v209
    %v758 = vunpack.c.h.b16 %v209
    %v759 = vunpack.c.l.b16 %v210
    %v760 = vunpack.c.l.b16 %v211
    %v761 = vunpack.c.h.b16 %v211
    %v762 = vunpack.c.l.b16 %v212
    %v763 = vunpack.c.l.b16 %v213
    %v764 = vunpack.c.h.b16 %v213
    %v765 = vunpack.c.l.b16 %v214
    %v766 = vunpack.c.l.b16 %v215
    %v767 = vunpack.c.h.b16 %v215
    %v768 = vunpack.c.l.b16 %v216
    %v769 = vunpack.c.l.b16 %v217
    %v770 = vunpack.c.h.b16 %v217
    %v771 = vunpack.c.l.b16 %v218
    %v772 = vunpack.c.l.b16 %v219
    %v773 = vunpack.c.h.b16 %v219
    %v774 = vunpack.c.l.b16 %v220
    %v775 = vunpack.c.l.b16 %v221
    %v776 = vunpack.c.h.b16 %v221
    %v777 = vunpack.c.l.b16 %v222
    %v778 = vunpack.c.l.b16 %v223
    %v779 = vunpack.c.h.b16 %v223
    %v780 = vunpack.c.l.b16 %v224
    %v781 = vunpack.c.l.b16 %v225
    %v782 = vunpack.c.h.b16 %v225
    %v783 = vunpack.c.l.b16 %v226
    %v784 = vunpack.c.l.b16 %v227
    %v785 = vunpack.c.h.b16 %v227
    %v786 = vunpack.c.l.b16 %v228
    %v787 = vunpack.c.l.b16 %v229
    %v788 = vunpack.c.h.b16 %v229
    %v789 = vunpack.c.l.b16 %v230
    %v790 = vunpack.c.l.b16 %v231
    %v791 = vunpack.c.h.b16 %v231
    %v792 = vunpack.c.l.b16 %v232
    %v793 = vunpack.c.l.b16 %v233
    %v794 = vunpack.c.h.b16 %v233
    %v795 = vunpack.c.l.b16 %v234
    %v796 = vunpack.c.l.b16 %v235
    %v797 = vunpack.c.h.b16 %v235
    %v798 = vunpack.c.l.b16 %v236
    %v799 = vunpack.c.l.b16 %v237
    %v800 = vunpack.c.h.b16 %v237
    %v801 = vunpack.c.l.b16 %v238
    %v802 = vunpack.c.l.b16 %v239
    %v803 = vunpack.c.h.b16 %v239
    %v804 = vunpack.c.l.b16 %v240
    %v805 = vunpack.c.l.b16 %v241
    %v806 = vunpack.c.h.b16 %v241
    %v807 = vunpack.c.l.b16 %v242
    %v808 = vunpack.c.l.b16 %v243
    %v809 = vunpack.c.h.b16 %v243
    %v810 = vunpack.c.l.b16 %v244
    %v811 = vunpack.c.l.b16 %v245
    %v812 = vunpack.c.h.b16 %v245
    %v813 = vunpack.c.l.b16 %v246
    %v814 = vunpack.c.l.b16 %v247
    %v815 = vunpack.c.h.b16 %v247
    %v816 = vunpack.c.l.b16 %v248
    %v817 = vunpack.c.l.b16 %v249
    %v818 = vunpack.c.h.b16 %v249
    %v819 = vunpack.c.l.b16 %v250
    %v820 = vunpack.c.l.b16 %v251
    %v821 = vunpack.c.h.b16 %v251
    %v822 = vunpack.c.l.b16 %v252
    %v823 = vunpack.c.l.b16 %v253
    %v824 = vunpack.c.h.b16 %v253
    %v825 = vunpack.c.l.b16 %v254
    %v826 = vunpack.c.l.b16 %v255
    %v827 = vunpack.c.h.b16 %v255
    %v828 = vunpack.c.l.b16 %v256
    %v829 = vunpack.c.l.b16 %v257
    %v830 = vunpack.c.h.b16 %v257
    %v831 = vunpack.c.l.b16 %v258
    %v832 = vunpack.c.l.b16 %v259
    %v833 = vunpack.c.h.b16 %v259
    %v834 = vunpack.c.l.b16 %v260
    %v835 = vunpack.c.l.b16 %v261
    %v836 = vunpack.c.h.b16 %v261
    %v837 = vunpack.c.l.b16 %v262
    %v838 = vunpack.c.l.b16 %v263
    %v839 = vunpack.c.h.b16 %v263
    %v840 = vunpack.c.l.b16 %v264
    %v841 = vunpack.c.l.b16 %v265
    %v842 = vunpack.c.h.b16 %v265
    %v843 = vunpack.c.l.b16 %v266
    %v844 = vunpack.c.l.b16 %v267
    %v845 = vunpack.c.h.b16 %v267
    %v846 = vunpack.c.l.b16 %v268
    %v847 = vunpack.c.l.b16 %v269
    %v848 = vunpack.c.h.b16 %v269
    %v849 = vunpack.c.l.b16 %v270
    %v850 = vunpack.c.l.b16 %v271
    %v851 = vunpack.c.h.b16 %v271
    %v852 = vunpack.c.l.b16 %v272
    %v853 = vunpack.c.l.b16 %v273
    %v854 = vunpack.c.h.b16 %v273
    %v855 = vunpack.c.l.b16 %v274
    %v856 = vunpack.c.l.b16 %v275
    %v857 = vunpack.c.h.b16 %v275
    %v858 = vunpack.c.l.b16 %v276
    %v859 = vunpack.c.l.b16 %v277
    %v860 = vunpack.c.h.b16 %v277
    %v861 = vunpack.c.l.b16 %v278
    %v862 = vunpack.c.l.b16 %v279
    %v863 = vunpack.c.h.b16 %v279
    %v864 = vunpack.c.l.b16 %v280
    %v865 = vunpack.c.l.b16 %v281
    %v866 = vunpack.c.h.b16 %v281
    %v867 = vunpack.c.l.b16 %v282
    %v868 = vpack.c.b16 %v535, %v532
    %v869 = vpack.c.b16 %v536, %v533
    %v870 = vpack.c.b16 %v537, %v534
    %v871 = vpack.c.b16 %v541, %v538
    %v872 = vpack.c.b16 %v542, %v539
    %v873 = vpack.c.b16 %v543, %v540
    %v874 = vpack.c.b16 %v547, %v544
    %v875 = vpack.c.b16 %v548, %v545
    %v876 = vpack.c.b16 %v549, %v546
    %v877 = vpack.c.b16 %v553, %v550
    %v878 = vpack.c.b16 %v554, %v551
    %v879 = vpack.c.b16 %v555, %v552
    %v880 = vpack.c.b16 %v559, %v556
    %v881 = vpack.c.b16 %v560, %v557
    %v882 = vpack.c.b16 %v561, %v558
    %v883 = vpack.c.b16 %v565, %v562
    %v884 = vpack.c.b16 %v566, %v563
    %v885 = vpack.c.b16 %v567, %v564
    %v886 = vpack.c.b16 %v571, %v568
    %v887 = vpack.c.b16 %v572, %v569
    %v888 = vpack.c.b16 %v573, %v570
    %v889 = vpack.c.b16 %v577, %v574
    %v890 = vpack.c.b16 %v578, %v575
    %v891 = vpack.c.b16 %v579, %v576
    %v892 = vpack.c.b16 %v583, %v580
    %v893 = vpack.c.b16 %v584, %v581
    %v894 = vpack.c.b16 %v585, %v582
    %v895 = vpack.c.b16 %v589, %v586
    %v896 = vpack.c.b16 %v590, %v587
    %v897 = vpack.c.b16 %v591, %v588
    %v898 = vpack.c.b16 %v595, %v592
    %v899 = vpack.c.b16 %v596, %v593
    %v900 = vpack.c.b16 %v597, %v594
    %v901 = vpack.c.b16 %v601, %v598
    %v902 = vpack.c.b16 %v602, %v599
    %v903 = vpack.c.b16 %v603, %v600
    %v904 = vpack.c.b16 %v607, %v604
    %v905 = vpack.c.b16 %v608, %v605
    %v906 = vpack.c.b16 %v609, %v606
    %v907 = vpack.c.b16 %v613, %v610
    %v908 = vpack.c.b16 %v614, %v611
    %v909 = vpack.c.b16 %v615, %v612
    %v910 = vpack.c.b16 %v619, %v616
    %v911 = vpack.c.b16 %v620, %v617
    %v912 = vpack.c.b16 %v621, %v618
    %v913 = vpack.c.b16 %v625, %v622
    %v914 = vpack.c.b16 %v626, %v623
    %v915 = vpack.c.b16 %v627, %v624
    %v916 = vpack.c.b16 %v631, %v628
    %v917 = vpack.c.b16 %v632, %v629
    %v918 = vpack.c.b16 %v633, %v630
    %v919 = vpack.c.b16 %v637, %v634
    %v920 = vpack.c.b16 %v638, %v635
    %v921 = vpack.c.b16 %v639, %v636
    %v922 = vpack.c.b16 %v643, %v640
    %v923 = vpack.c.b16 %v644, %v641
    %v924 = vpack.c.b16 %v645, %v642
    %v925 = vpack.c.b16 %v649, %v646
    %v926 = vpack.c.b16 %v650, %v647
    %v927 = vpack.c.b16 %v651, %v648
    %v928 = vpack.c.b16 %v655, %v652
    %v929 = vpack.c.b16 %v656, %v653
    %v930 = vpack.c.b16 %v657, %v654
    %v931 = vpack.c.b16 %v661, %v658
    %v932 = vpack.c.b16 %v662, %v659
    %v933 = vpack.c.b16 %v663, %v660
    %v934 = vpack.c.b16 %v667, %v664
    %v935 = vpack.c.b16 %v668, %v665
    %v936 = vpack.c.b16 %v669, %v666
    %v937 = vpack.c.b16 %v673, %v670
    %v938 = vpack.c.b16 %v674, %v671
    %v939 = vpack.c.b16 %v675, %v672
    %v940 = vpack.c.b16 %v679, %v676
    %v941 = vpack.c.b16 %v680, %v677
    %v942 = vpack.c.b16 %v681, %v678
    %v943 = vpack.c.b16 %v685, %v682
    %v944 = vpack.c.b16 %v686, %v683
    %v945 = vpack.c.b16 %v687, %v684
    %v946 = vpack.c.b16 %v691, %v688
    %v947 = vpack.c.b16 %v692, %v689
    %v948 = vpack.c.b16 %v693, %v690
    %v949 = vpack.c.b16 %v697, %v694
    %v950 = vpack.c.b16 %v698, %v695
    %v951 = vpack.c.b16 %v699, %v696
    %v952 = vpack.c.b16 %v703, %v700
    %v953 = vpack.c.b16 %v704, %v701
    %v954 = vpack.c.b16 %v705, %v702
    %v955 = vpack.c.b16 %v709, %v706
    %v956 = vpack.c.b16 %v710, %v707
    %v957 = vpack.c.b16 %v711, %v708
    %v958 = vpack.c.b16 %v715, %v712
    %v959 = vpack.c.b16 %v716, %v713
    %v960 = vpack.c.b16 %v717, %v714
    %v961 = vpack.c.b16 %v721, %v718
    %v962 = vpack.c.b16 %v722, %v719
    %v963 = vpack.c.b16 %v723, %v720
    %v964 = vpack.c.b16 %v727, %v724
    %v965 = vpack.c.b16 %v728, %v725
    %v966 = vpack.c.b16 %v729, %v726
    %v967 = vpack.c.b16 %v733, %v730
    %v968 = vpack.c.b16 %v734, %v731
    %v969 = vpack.c.b16 %v735, %v732
    %v970 = vpack.c.b16 %v739, %v736
    %v971 = vpack.c.b16 %v740, %v737
    %v972 = vpack.c.b16 %v741, %v738
    %v973 = vpack.c.b16 %v745, %v742
    %v974 = vpack.c.b16 %v746, %v743
    %v975 = vpack.c.b16 %v747, %v744
    %v976 = vpack.c.b16 %v751, %v748
    %v977 = vpack.c.b16 %v752, %v749
    %v978 = vpack.c.b16 %v753, %v750
    %v979 = vpack.c.b16 %v757, %v754
    %v980 = vpack.c.b16 %v758, %v755
    %v981 = vpack.c.b16 %v759, %v756
    %v982 = vpack.c.b16 %v763, %v760
    %v983 = vpack.c.b16 %v764, %v761
    %v984 = vpack.c.b16 %v765, %v762
    %v985 = vpack.c.b16 %v769, %v766
    %v986 = vpack.c.b16 %v770, %v767
    %v987 = vpack.c.b16 %v771, %v768
    %v988 = vpack.c.b16 %v775, %v772
    %v989 = vpack.c.b16 %v776, %v773
    %v990 = vpack.c.b16 %v777, %v774
    %v991 = vpack.c.b16 %v781, %v778
    %v992 = vpack.c.b16 %v782, %v779
    %v993 = vpack.c.b16 %v783, %v780
    %v994 = vpack.c.b16 %v787, %v784
    %v995 = vpack.c.b16 %v788, %v785
    %v996 = vpack.c.b16 %v789, %v786
    %v997 = vpack.c.b16 %v793, %v790
    %v998 = vpack.c.b16 %v794, %v791
    %v999 = vpack.c.b16 %v795, %v792
    %v1000 = vpack.c.b16 %v799, %v796
    %v1001 = vpack.c.b16 %v800, %v797
    %v1002 = vpack.c.b16 %v801, %v798
    %v1003 = vpack.c.b16 %v805, %v802
    %v1004 = vpack.c.b16 %v806, %v803
    %v1005 = vpack.c.b16 %v807, %v804
    %v1006 = vpack.c.b16 %v811, %v808
    %v1007 = vpack.c.b16 %v812, %v809
    %v1008 = vpack.c.b16 %v813, %v810
    %v1009 = vpack.c.b16 %v817, %v814
    %v1010 = vpack.c.b16 %v818, %v815
    %v1011 = vpack.c.b16 %v819, %v816
    %v1012 = vpack.c.b16 %v823, %v820
    %v1013 = vpack.c.b16 %v824, %v821
    %v1014 = vpack.c.b16 %v825, %v822
    %v1015 = vpack.c.b16 %v829, %v826
    %v1016 = vpack.c.b16 %v830, %v827
    %v1017 = vpack.c.b16 %v831, %v828
    %v1018 = vpack.c.b16 %v835, %v832
    %v1019 = vpack.c.b16 %v836, %v833
    %v1020 = vpack.c.b16 %v837, %v834
    %v1021 = vpack.c.b16 %v841, %v838
    %v1022 = vpack.c.b16 %v842, %v839
    %v1023 = vpack.c.b16 %v843, %v840
    %v1024 = vpack.c.b16 %v847, %v844
    %v1025 = vpack.c.b16 %v848, %v845
    %v1026 = vpack.c.b16 %v849, %v846
    %v1027 = vpack.c.b16 %v853, %v850
    %v1028 = vpack.c.b16 %v854, %v851
    %v1029 = vpack.c.b16 %v855, %v852
    %v1030 = vpack.c.b16 %v859, %v856
    %v1031 = vpack.c.b16 %v860, %v857
    %v1032 = vpack.c.b16 %v861, %v858
    %v1033 = vpack.c.b16 %v865, %v862
    %v1034 = vpack.c.b16 %v866, %v863
    %v1035 = vpack.c.b16 %v867, %v864
    %1204 = vmatprep.subr.bf16.mxu0 %v890
    %1205 = vmatpush1.bf16.msra.mxu0 %v889
    %1206 = vmatprep.subr.bf16.mxu0 %v887
    %1207 = vmatpush1.bf16.msra.mxu0 %v886
    %1208 = vmatprep.subr.bf16.mxu0 %v884
    %1209 = vmatpush1.bf16.msra.mxu0 %v883
    %1210 = vmatprep.subr.bf16.mxu0 %v881
    %1211 = vmatpush1.bf16.msra.mxu0 %v880
    %1212 = vmatprep.subr.bf16.mxu0 %v878
    %1213 = vmatpush1.bf16.msra.mxu0 %v877
    %1214 = vmatprep.subr.bf16.mxu0 %v875
    %1215 = vmatpush1.bf16.msra.mxu0 %v874
    %1216 = vmatprep.subr.bf16.mxu0 %v872
    %1217 = vmatpush1.bf16.msra.mxu0 %v871
    %1218 = vmatprep.subr.bf16.mxu0 %v869
    %1219 = vmatpush1.bf16.msra.mxu0 %v868
    %1220 = vmatprep.subr.bf16.mxu0 %v914
    %1221 = vmatpush2.bf16.msra.mxu0 %v913
    %1222 = vmatprep.subr.bf16.mxu0 %v911
    %1223 = vmatpush2.bf16.msra.mxu0 %v910
    %1224 = vmatprep.subr.bf16.mxu0 %v908
    %1225 = vmatpush2.bf16.msra.mxu0 %v907
    %1226 = vmatprep.subr.bf16.mxu0 %v905
    %1227 = vmatpush2.bf16.msra.mxu0 %v904
    %1228 = vmatprep.subr.bf16.mxu0 %v902
    %1229 = vmatpush2.bf16.msra.mxu0 %v901
    %1230 = vmatprep.subr.bf16.mxu0 %v899
    %1231 = vmatpush2.bf16.msra.mxu0 %v898
    %1232 = vmatprep.subr.bf16.mxu0 %v896
    %1233 = vmatpush2.bf16.msra.mxu0 %v895
    %1234 = vmatprep.subr.bf16.mxu0 %v893
    %1235 = vmatpush2.bf16.msra.mxu0 %v892
    %1236 = vmatprep.mubr.bf16.mxu0 %v295
    %1237 = vmatmul.mubr.bf16.gmra.mxu0 %v294
    %v1238 = vpop.f32.mrf.mxu0
    %v1239 = vadd.f32 0.0, %v1238
    %v1240 = vpop.f32.mrf.mxu0
    %v1241 = vadd.f32 0.0, %v1240
    %v1242 = vpop.f32.mrf.mxu0
    %v1243 = vpop.f32.mrf.mxu0
    %1244 = vdwg.mxu0
    %1245 = vmatprep.subr.bf16.mxu0 %v938
    %1246 = vmatpush1.bf16.msra.mxu0 %v937
    %1247 = vmatprep.subr.bf16.mxu0 %v935
    %1248 = vmatpush1.bf16.msra.mxu0 %v934
    %1249 = vmatprep.subr.bf16.mxu0 %v932
    %1250 = vmatpush1.bf16.msra.mxu0 %v931
    %1251 = vmatprep.subr.bf16.mxu0 %v929
    %1252 = vmatpush1.bf16.msra.mxu0 %v928
    %1253 = vmatprep.subr.bf16.mxu0 %v926
    %1254 = vmatpush1.bf16.msra.mxu0 %v925
    %1255 = vmatprep.subr.bf16.mxu0 %v923
    %1256 = vmatpush1.bf16.msra.mxu0 %v922
    %1257 = vmatprep.subr.bf16.mxu0 %v920
    %1258 = vmatpush1.bf16.msra.mxu0 %v919
    %1259 = vmatprep.subr.bf16.mxu0 %v917
    %1260 = vmatpush1.bf16.msra.mxu0 %v916
    %1261 = vmatprep.subr.bf16.mxu0 %v962
    %1262 = vmatpush2.bf16.msra.mxu0 %v961
    %1263 = vmatprep.subr.bf16.mxu0 %v959
    %1264 = vmatpush2.bf16.msra.mxu0 %v958
    %1265 = vmatprep.subr.bf16.mxu0 %v956
    %1266 = vmatpush2.bf16.msra.mxu0 %v955
    %1267 = vmatprep.subr.bf16.mxu0 %v953
    %1268 = vmatpush2.bf16.msra.mxu0 %v952
    %1269 = vmatprep.subr.bf16.mxu0 %v950
    %1270 = vmatpush2.bf16.msra.mxu0 %v949
    %1271 = vmatprep.subr.bf16.mxu0 %v947
    %1272 = vmatpush2.bf16.msra.mxu0 %v946
    %1273 = vmatprep.subr.bf16.mxu0 %v944
    %1274 = vmatpush2.bf16.msra.mxu0 %v943
    %1275 = vmatprep.subr.bf16.mxu0 %v941
    %1276 = vmatpush2.bf16.msra.mxu0 %v940
    %1277 = vmatprep.mubr.bf16.mxu0 %v297
    %1278 = vmatmul.mubr.bf16.gmra.mxu0 %v296
    %v1279 = vpop.f32.mrf.mxu0
    %v1280 = vadd.f32 %v1239, %v1279
    %v1281 = vpop.f32.mrf.mxu0
    %v1282 = vadd.f32 %v1241, %v1281
    %v1283 = vpop.f32.mrf.mxu0
    %v1284 = vpop.f32.mrf.mxu0
    %1285 = vdwg.mxu0
    %1286 = vmatprep.subr.bf16.mxu0 %v986
    %1287 = vmatpush1.bf16.msra.mxu0 %v985
    %1288 = vmatprep.subr.bf16.mxu0 %v983
    %1289 = vmatpush1.bf16.msra.mxu0 %v982
    %1290 = vmatprep.subr.bf16.mxu0 %v980
    %1291 = vmatpush1.bf16.msra.mxu0 %v979
    %1292 = vmatprep.subr.bf16.mxu0 %v977
    %1293 = vmatpush1.bf16.msra.mxu0 %v976
    %1294 = vmatprep.subr.bf16.mxu0 %v974
    %1295 = vmatpush1.bf16.msra.mxu0 %v973
    %1296 = vmatprep.subr.bf16.mxu0 %v971
    %1297 = vmatpush1.bf16.msra.mxu0 %v970
    %1298 = vmatprep.subr.bf16.mxu0 %v968
    %1299 = vmatpush1.bf16.msra.mxu0 %v967
    %1300 = vmatprep.subr.bf16.mxu0 %v965
    %1301 = vmatpush1.bf16.msra.mxu0 %v964
    %1302 = vmatprep.subr.bf16.mxu0 %v1010
    %1303 = vmatpush2.bf16.msra.mxu0 %v1009
    %1304 = vmatprep.subr.bf16.mxu0 %v1007
    %1305 = vmatpush2.bf16.msra.mxu0 %v1006
    %1306 = vmatprep.subr.bf16.mxu0 %v1004
    %1307 = vmatpush2.bf16.msra.mxu0 %v1003
    %1308 = vmatprep.subr.bf16.mxu0 %v1001
    %1309 = vmatpush2.bf16.msra.mxu0 %v1000
    %1310 = vmatprep.subr.bf16.mxu0 %v998
    %1311 = vmatpush2.bf16.msra.mxu0 %v997
    %1312 = vmatprep.subr.bf16.mxu0 %v995
    %1313 = vmatpush2.bf16.msra.mxu0 %v994
    %1314 = vmatprep.subr.bf16.mxu0 %v992
    %1315 = vmatpush2.bf16.msra.mxu0 %v991
    %1316 = vmatprep.subr.bf16.mxu0 %v989
    %1317 = vmatpush2.bf16.msra.mxu0 %v988
    %1318 = vmatprep.mubr.bf16.mxu0 %v299
    %1319 = vmatmul.mubr.bf16.gmra.mxu0 %v298
    %v1320 = vpop.f32.mrf.mxu0
    %v1321 = vadd.f32 %v1280, %v1320
    %v1322 = vpop.f32.mrf.mxu0
    %v1323 = vadd.f32 %v1282, %v1322
    %v1324 = vpop.f32.mrf.mxu0
    %v1325 = vpop.f32.mrf.mxu0
    %1326 = vdwg.mxu0
    %1327 = vmatprep.subr.bf16.mxu0 %v1034
    %1328 = vmatpush1.bf16.msra.mxu0 %v1033
    %1329 = vmatprep.subr.bf16.mxu0 %v1031
    %1330 = vmatpush1.bf16.msra.mxu0 %v1030
    %1331 = vmatprep.subr.bf16.mxu0 %v1028
    %1332 = vmatpush1.bf16.msra.mxu0 %v1027
    %1333 = vmatprep.subr.bf16.mxu0 %v1025
    %1334 = vmatpush1.bf16.msra.mxu0 %v1024
    %1335 = vmatprep.subr.bf16.mxu0 %v1022
    %1336 = vmatpush1.bf16.msra.mxu0 %v1021
    %1337 = vmatprep.subr.bf16.mxu0 %v1019
    %1338 = vmatpush1.bf16.msra.mxu0 %v1018
    %1339 = vmatprep.subr.bf16.mxu0 %v1016
    %1340 = vmatpush1.bf16.msra.mxu0 %v1015
    %1341 = vmatprep.subr.bf16.mxu0 %v1013
    %1342 = vmatpush1.bf16.msra.mxu0 %v1012
    %1343 = vmatprep.subr.bf16.mxu0 0
    %1344 = vmatpush2.bf16.msra.mxu0 0
    %1345 = vmatprep.subr.bf16.mxu0 0
    %1346 = vmatpush2.bf16.msra.mxu0 0
    %1347 = vmatprep.subr.bf16.mxu0 0
    %1348 = vmatpush2.bf16.msra.mxu0 0
    %1349 = vmatprep.subr.bf16.mxu0 0
    %1350 = vmatpush2.bf16.msra.mxu0 0
    %1351 = vmatprep.subr.bf16.mxu0 0
    %1352 = vmatpush2.bf16.msra.mxu0 0
    %1353 = vmatprep.subr.bf16.mxu0 0
    %1354 = vmatpush2.bf16.msra.mxu0 0
    %1355 = vmatprep.subr.bf16.mxu0 0
    %1356 = vmatpush2.bf16.msra.mxu0 0
    %1357 = vmatprep.subr.bf16.mxu0 0
    %1358 = vmatpush2.bf16.msra.mxu0 0
    %1359 = vmatprep.mubr.bf16.mxu0 0
    %1360 = vmatmul.mubr.bf16.gmra.mxu0 %v300
    %v1361 = vpop.f32.mrf.mxu0
    %v1362 = vadd.f32 %v1321, %v1361
    %v1363 = vpop.f32.mrf.mxu0
    %v1364 = vadd.f32 %v1323, %v1363
    %v1365 = vpop.f32.mrf.mxu0
    %v1366 = vpop.f32.mrf.mxu0
    %1367 = vdwg.mxu0
    %1368 = vmatprep.subr.bf16.mxu0 0
    %1369 = vmatpush1.bf16.msra.mxu0 %v891
    %1370 = vmatprep.subr.bf16.mxu0 0
    %1371 = vmatpush1.bf16.msra.mxu0 %v888
    %1372 = vmatprep.subr.bf16.mxu0 0
    %1373 = vmatpush1.bf16.msra.mxu0 %v885
    %1374 = vmatprep.subr.bf16.mxu0 0
    %1375 = vmatpush1.bf16.msra.mxu0 %v882
    %1376 = vmatprep.subr.bf16.mxu0 0
    %1377 = vmatpush1.bf16.msra.mxu0 %v879
    %1378 = vmatprep.subr.bf16.mxu0 0
    %1379 = vmatpush1.bf16.msra.mxu0 %v876
    %1380 = vmatprep.subr.bf16.mxu0 0
    %1381 = vmatpush1.bf16.msra.mxu0 %v873
    %1382 = vmatprep.subr.bf16.mxu0 0
    %1383 = vmatpush1.bf16.msra.mxu0 %v870
    %1384 = vmatprep.subr.bf16.mxu0 0
    %1385 = vmatpush2.bf16.msra.mxu0 %v915
    %1386 = vmatprep.subr.bf16.mxu0 0
    %1387 = vmatpush2.bf16.msra.mxu0 %v912
    %1388 = vmatprep.subr.bf16.mxu0 0
    %1389 = vmatpush2.bf16.msra.mxu0 %v909
    %1390 = vmatprep.subr.bf16.mxu0 0
    %1391 = vmatpush2.bf16.msra.mxu0 %v906
    %1392 = vmatprep.subr.bf16.mxu0 0
    %1393 = vmatpush2.bf16.msra.mxu0 %v903
    %1394 = vmatprep.subr.bf16.mxu0 0
    %1395 = vmatpush2.bf16.msra.mxu0 %v900
    %1396 = vmatprep.subr.bf16.mxu0 0
    %1397 = vmatpush2.bf16.msra.mxu0 %v897
    %1398 = vmatprep.subr.bf16.mxu0 0
    %1399 = vmatpush2.bf16.msra.mxu0 %v894
    %1400 = vmatprep.mubr.bf16.mxu0 %v295
    %1401 = vmatmul.mubr.bf16.gmra.mxu0 %v294
    %v1402 = vpop.f32.mrf.mxu0
    %v1403 = vadd.f32 0.0, %v1402
    %v1404 = vpop.f32.mrf.mxu0
    %v1405 = vpop.f32.mrf.mxu0
    %v1406 = vpop.f32.mrf.mxu0
    %1407 = vdwg.mxu0
    %1408 = vmatprep.subr.bf16.mxu0 0
    %1409 = vmatpush1.bf16.msra.mxu0 %v939
    %1410 = vmatprep.subr.bf16.mxu0 0
    %1411 = vmatpush1.bf16.msra.mxu0 %v936
    %1412 = vmatprep.subr.bf16.mxu0 0
    %1413 = vmatpush1.bf16.msra.mxu0 %v933
    %1414 = vmatprep.subr.bf16.mxu0 0
    %1415 = vmatpush1.bf16.msra.mxu0 %v930
    %1416 = vmatprep.subr.bf16.mxu0 0
    %1417 = vmatpush1.bf16.msra.mxu0 %v927
    %1418 = vmatprep.subr.bf16.mxu0 0
    %1419 = vmatpush1.bf16.msra.mxu0 %v924
    %1420 = vmatprep.subr.bf16.mxu0 0
    %1421 = vmatpush1.bf16.msra.mxu0 %v921
    %1422 = vmatprep.subr.bf16.mxu0 0
    %1423 = vmatpush1.bf16.msra.mxu0 %v918
    %1424 = vmatprep.subr.bf16.mxu0 0
    %1425 = vmatpush2.bf16.msra.mxu0 %v963
    %1426 = vmatprep.subr.bf16.mxu0 0
    %1427 = vmatpush2.bf16.msra.mxu0 %v960
    %1428 = vmatprep.subr.bf16.mxu0 0
    %1429 = vmatpush2.bf16.msra.mxu0 %v957
    %1430 = vmatprep.subr.bf16.mxu0 0
    %1431 = vmatpush2.bf16.msra.mxu0 %v954
    %1432 = vmatprep.subr.bf16.mxu0 0
    %1433 = vmatpush2.bf16.msra.mxu0 %v951
    %1434 = vmatprep.subr.bf16.mxu0 0
    %1435 = vmatpush2.bf16.msra.mxu0 %v948
    %1436 = vmatprep.subr.bf16.mxu0 0
    %1437 = vmatpush2.bf16.msra.mxu0 %v945
    %1438 = vmatprep.subr.bf16.mxu0 0
    %1439 = vmatpush2.bf16.msra.mxu0 %v942
    %1440 = vmatprep.mubr.bf16.mxu0 %v297
    %1441 = vmatmul.mubr.bf16.gmra.mxu0 %v296
    %v1442 = vpop.f32.mrf.mxu0
    %v1443 = vadd.f32 %v1403, %v1442
    %v1444 = vpop.f32.mrf.mxu0
    %v1445 = vpop.f32.mrf.mxu0
    %v1446 = vpop.f32.mrf.mxu0
    %1447 = vdwg.mxu0
    %1448 = vmatprep.subr.bf16.mxu0 0
    %1449 = vmatpush1.bf16.msra.mxu0 %v987
    %1450 = vmatprep.subr.bf16.mxu0 0
    %1451 = vmatpush1.bf16.msra.mxu0 %v984
    %1452 = vmatprep.subr.bf16.mxu0 0
    %1453 = vmatpush1.bf16.msra.mxu0 %v981
    %1454 = vmatprep.subr.bf16.mxu0 0
    %1455 = vmatpush1.bf16.msra.mxu0 %v978
    %1456 = vmatprep.subr.bf16.mxu0 0
    %1457 = vmatpush1.bf16.msra.mxu0 %v975
    %1458 = vmatprep.subr.bf16.mxu0 0
    %1459 = vmatpush1.bf16.msra.mxu0 %v972
    %1460 = vmatprep.subr.bf16.mxu0 0
    %1461 = vmatpush1.bf16.msra.mxu0 %v969
    %1462 = vmatprep.subr.bf16.mxu0 0
    %1463 = vmatpush1.bf16.msra.mxu0 %v966
    %1464 = vmatprep.subr.bf16.mxu0 0
    %1465 = vmatpush2.bf16.msra.mxu0 %v1011
    %1466 = vmatprep.subr.bf16.mxu0 0
    %1467 = vmatpush2.bf16.msra.mxu0 %v1008
    %1468 = vmatprep.subr.bf16.mxu0 0
    %1469 = vmatpush2.bf16.msra.mxu0 %v1005
    %1470 = vmatprep.subr.bf16.mxu0 0
    %1471 = vmatpush2.bf16.msra.mxu0 %v1002
    %1472 = vmatprep.subr.bf16.mxu0 0
    %1473 = vmatpush2.bf16.msra.mxu0 %v999
    %1474 = vmatprep.subr.bf16.mxu0 0
    %1475 = vmatpush2.bf16.msra.mxu0 %v996
    %1476 = vmatprep.subr.bf16.mxu0 0
    %1477 = vmatpush2.bf16.msra.mxu0 %v993
    %1478 = vmatprep.subr.bf16.mxu0 0
    %1479 = vmatpush2.bf16.msra.mxu0 %v990
    %1480 = vmatprep.mubr.bf16.mxu0 %v299
    %1481 = vmatmul.mubr.bf16.gmra.mxu0 %v298
    %v1482 = vpop.f32.mrf.mxu0
    %v1483 = vadd.f32 %v1443, %v1482
    %v1484 = vpop.f32.mrf.mxu0
    %v1485 = vpop.f32.mrf.mxu0
    %v1486 = vpop.f32.mrf.mxu0
    %1487 = vdwg.mxu0
    %1488 = vmatprep.subr.bf16.mxu0 0
    %1489 = vmatpush1.bf16.msra.mxu0 %v1035
    %1490 = vmatprep.subr.bf16.mxu0 0
    %1491 = vmatpush1.bf16.msra.mxu0 %v1032
    %1492 = vmatprep.subr.bf16.mxu0 0
    %1493 = vmatpush1.bf16.msra.mxu0 %v1029
    %1494 = vmatprep.subr.bf16.mxu0 0
    %1495 = vmatpush1.bf16.msra.mxu0 %v1026
    %1496 = vmatprep.subr.bf16.mxu0 0
    %1497 = vmatpush1.bf16.msra.mxu0 %v1023
    %1498 = vmatprep.subr.bf16.mxu0 0
    %1499 = vmatpush1.bf16.msra.mxu0 %v1020
    %1500 = vmatprep.subr.bf16.mxu0 0
    %1501 = vmatpush1.bf16.msra.mxu0 %v1017
    %1502 = vmatprep.subr.bf16.mxu0 0
    %1503 = vmatpush1.bf16.msra.mxu0 %v1014
    %1504 = vmatprep.subr.bf16.mxu0 0
    %1505 = vmatpush2.bf16.msra.mxu0 0
    %1506 = vmatprep.subr.bf16.mxu0 0
    %1507 = vmatpush2.bf16.msra.mxu0 0
    %1508 = vmatprep.subr.bf16.mxu0 0
    %1509 = vmatpush2.bf16.msra.mxu0 0
    %1510 = vmatprep.subr.bf16.mxu0 0
    %1511 = vmatpush2.bf16.msra.mxu0 0
    %1512 = vmatprep.subr.bf16.mxu0 0
    %1513 = vmatpush2.bf16.msra.mxu0 0
    %1514 = vmatprep.subr.bf16.mxu0 0
    %1515 = vmatpush2.bf16.msra.mxu0 0
    %1516 = vmatprep.subr.bf16.mxu0 0
    %1517 = vmatpush2.bf16.msra.mxu0 0
    %1518 = vmatprep.subr.bf16.mxu0 0
    %1519 = vmatpush2.bf16.msra.mxu0 0
    %1520 = vmatprep.mubr.bf16.mxu0 0
    %1521 = vmatmul.mubr.bf16.gmra.mxu0 %v300
    %v1522 = vpop.f32.mrf.mxu0
    %v1523 = vadd.f32 %v1483, %v1522
    %v1524 = vpop.f32.mrf.mxu0
    %v1525 = vpop.f32.mrf.mxu0
    %v1526 = vpop.f32.mrf.mxu0
    %1527 = vdwg.mxu0
    %v1528 = vrot.slane %v1362, 4
    %v1529 = vadd.f32 %v1362, %v1528
    %v1530 = vrot.slane %v1529, 2
    %v1531 = vadd.f32 %v1529, %v1530
    %v1532 = vrot.slane %v1531, 1
    %v1533 = vadd.f32 %v1531, %v1532
    %v1534 = vrot.slane %v1364, 4
    %v1535 = vadd.f32 %v1364, %v1534
    %v1536 = vrot.slane %v1535, 2
    %v1537 = vadd.f32 %v1535, %v1536
    %v1538 = vrot.slane %v1537, 1
    %v1539 = vadd.f32 %v1537, %v1538
    %v1540 = vrot.slane %v1523, 4
    %v1541 = vadd.f32 %v1523, %v1540
    %v1542 = vrot.slane %v1541, 2
    %v1543 = vadd.f32 %v1541, %v1542
    %v1544 = vrot.slane %v1543, 1
    %v1545 = vadd.f32 %v1543, %v1544
    %v1546 = vmul.f32 %v1362, %v1362
    %v1547 = vmul.f32 %v1364, %v1364
    %v1548 = vmul.f32 %v1523, %v1523
    %v1549 = vrot.slane %v1546, 4
    %v1550 = vadd.f32 %v1546, %v1549
    %v1551 = vrot.slane %v1550, 2
    %v1552 = vadd.f32 %v1550, %v1551
    %v1553 = vrot.slane %v1552, 1
    %v1554 = vadd.f32 %v1552, %v1553
    %v1555 = vrot.slane %v1547, 4
    %v1556 = vadd.f32 %v1547, %v1555
    %v1557 = vrot.slane %v1556, 2
    %v1558 = vadd.f32 %v1556, %v1557
    %v1559 = vrot.slane %v1558, 1
    %v1560 = vadd.f32 %v1558, %v1559
    %v1561 = vrot.slane %v1548, 4
    %v1562 = vadd.f32 %v1548, %v1561
    %v1563 = vrot.slane %v1562, 2
    %v1564 = vadd.f32 %v1562, %v1563
    %v1565 = vrot.slane %v1564, 1
    %v1566 = vadd.f32 %v1564, %v1565
    %v1567 = vmul.f32 %v1533, 0.125
    %v1568 = vmul.f32 %v1539, 0.125
    %v1569 = vmul.f32 %v1545, 0.125
    %v1570 = vmul.f32 %v1554, 0.125
    %v1571 = vmul.f32 %v1560, 0.125
    %v1572 = vmul.f32 %v1566, 0.125
    %v1573 = vmul.f32 %v1567, %v1567
    %v1574 = vmul.f32 %v1568, %v1568
    %v1575 = vmul.f32 %v1569, %v1569
    %v1576 = vsub.f32 %v1570, %v1573
    %v1577 = vsub.f32 %v1571, %v1574
    %v1578 = vsub.f32 %v1572, %v1575
    %v1579 = vadd.f32 %v1576, 1e-05
    %v1580 = vadd.f32 %v1577, 1e-05
    %v1581 = vadd.f32 %v1578, 1e-05
    %v1582 = vrsqrt.pop %v1579
    %v1583 = vrsqrt.pop %v1580
    %v1584 = vrsqrt.pop %v1581
    %v1588 = vcombine.low %v1582, %v1583
    %v1590 = vunpack.c.l.s4 1966171168
    %v1591 = vunpack.c.0.s8 %v1590
    %v1592 = vlaneseq
    %v1593 = vshrl.u32 %v1592, 7
    %v1594 = vsub.s32 %v1591, %v1593
    %v1595 = vrot.slane %v1588, %v1594
    %v1597 = vunpack.c.l.s4 1966171168
    %v1598 = vunpack.c.0.s8 %v1597
    %v1599 = vlaneseq
    %v1600 = vshrl.u32 %v1599, 7
    %v1601 = vsub.s32 %v1598, %v1600
    %v1602 = vrot.slane %v1584, %v1601
    %v1603 = vcombine.low %v1595, %v1602
    %v1605 = vunpack.c.l.s4 1966171168
    %v1606 = vunpack.c.0.s8 %v1605
    %v1607 = vlaneseq
    %v1608 = vshrl.u32 %v1607, 7
    %v1609 = vsub.s32 %v1606, %v1608
    %v1610 = vrot.slane %v1603, %v1609
    %v1612 = vmul.f32 %v50, %v1610
    %v1614 = vlaneseq
    %v1615 = vshrl.u32 %v1614, 7
    %v1616 = vsub.s32 0, %v1615
    %v1617 = vrot.slane %v1612, %v1616
    %v1618 = vlaneseq
    %v1619 = vshrl.u32 %v1618, 7
    %v1620 = vsub.s32 1, %v1619
    %v1621 = vrot.slane %v1612, %v1620
    %v1622 = vlaneseq
    %v1623 = vshrl.u32 %v1622, 7
    %v1624 = vsub.s32 2, %v1623
    %v1625 = vrot.slane %v1612, %v1624
    %v1629 = vmul.f32 %v1567, %v1617
    %v1630 = vmul.f32 %v1568, %v1621
    %v1631 = vmul.f32 %v1569, %v1625
    %v1635 = vcombine.low %v1629, %v1630
    %v1637 = vunpack.c.l.s4 1966171168
    %v1638 = vunpack.c.0.s8 %v1637
    %v1639 = vlaneseq
    %v1640 = vshrl.u32 %v1639, 7
    %v1641 = vsub.s32 %v1638, %v1640
    %v1642 = vrot.slane %v1635, %v1641
    %v1644 = vunpack.c.l.s4 1966171168
    %v1645 = vunpack.c.0.s8 %v1644
    %v1646 = vlaneseq
    %v1647 = vshrl.u32 %v1646, 7
    %v1648 = vsub.s32 %v1645, %v1647
    %v1649 = vrot.slane %v1631, %v1648
    %v1650 = vcombine.low %v1642, %v1649
    %v1652 = vunpack.c.l.s4 1966171168
    %v1653 = vunpack.c.0.s8 %v1652
    %v1654 = vlaneseq
    %v1655 = vshrl.u32 %v1654, 7
    %v1656 = vsub.s32 %v1653, %v1655
    %v1657 = vrot.slane %v1650, %v1656
    %v1659 = vsub.f32 %v51, %v1657
    %v1660 = vmul.f32 %v1362, %v1617
    %v1661 = vmul.f32 %v1364, %v1621
    %v1662 = vmul.f32 %v1523, %v1625
    %v1664 = vlaneseq
    %v1665 = vshrl.u32 %v1664, 7
    %v1666 = vsub.s32 0, %v1665
    %v1667 = vrot.slane %v1659, %v1666
    %v1668 = vlaneseq
    %v1669 = vshrl.u32 %v1668, 7
    %v1670 = vsub.s32 1, %v1669
    %v1671 = vrot.slane %v1659, %v1670
    %v1672 = vlaneseq
    %v1673 = vshrl.u32 %v1672, 7
    %v1674 = vsub.s32 2, %v1673
    %v1675 = vrot.slane %v1659, %v1674
    %v1679 = vadd.f32 %v1660, %v1667
    %v1680 = vadd.f32 %v1661, %v1671
    %v1681 = vadd.f32 %v1662, %v1675
    %v1682 = vmax.f32 %v1679, 0.0
    %v1683 = vmax.f32 %v1680, 0.0
    %v1684 = vmax.f32 %v1681, 0.0
    %v1685 = vpack.c.bf16 %v1682, %v1682
    %v1686 = vpack.c.bf16 %v1683, %v1683
    %v1687 = vpack.c.bf16 %v1684, %v1684
    %v1688 = vld [vmem:[#allocation5] sm:$0xf]
    %v1689 = vld [vmem:[#allocation5 + $0x4] sm:$0xf]
    %v1690 = vld [vmem:[#allocation5 + $0x8] sm:$0xf]
    %v1691 = vld [vmem:[#allocation5 + $0xc] sm:$0xf]
    %v1692 = vld [vmem:[#allocation5 + $0x10] sm:$0xf]
    %v1693 = vld [vmem:[#allocation5 + $0x14] sm:$0xf]
    %v1694 = vld [vmem:[#allocation5 + $0x18] sm:$0xf]
    %v1695 = vld [vmem:[#allocation5 + $0x1c] sm:$0xf]
    %v1696 = vld [vmem:[#allocation5 + $0x20] sm:$0xf]
    %v1697 = vld [vmem:[#allocation5 + $0x24] sm:$0xf]
    %v1698 = vld [vmem:[#allocation5 + $0x28] sm:$0xf]
    %v1699 = vld [vmem:[#allocation5 + $0x2c] sm:$0xf]
    %v1700 = vld [vmem:[#allocation5 + $0x30] sm:$0xf]
    %v1701 = vld [vmem:[#allocation5 + $0x34] sm:$0xf]
    %v1702 = vld [vmem:[#allocation5 + $0x38] sm:$0xf]
    %v1703 = vld [vmem:[#allocation5 + $0x3c] sm:$0xf]
    %v1704 = vld [vmem:[#allocation5 + $0x40] sm:$0xf]
    %v1705 = vld [vmem:[#allocation5 + $0x44] sm:$0xf]
    %v1706 = vld [vmem:[#allocation5 + $0x48] sm:$0xf]
    %v1707 = vld [vmem:[#allocation5 + $0x4c] sm:$0xf]
    %v1708 = vld [vmem:[#allocation5 + $0x50] sm:$0xf]
    %v1709 = vld [vmem:[#allocation5 + $0x54] sm:$0xf]
    %v1710 = vld [vmem:[#allocation5 + $0x58] sm:$0xf]
    %v1711 = vld [vmem:[#allocation5 + $0x5c] sm:$0xf]
    %v1712 = vld [vmem:[#allocation5 + $0x60] sm:$0xf]
    %v1713 = vld [vmem:[#allocation5 + $0x64] sm:$0xf]
    %v1714 = vld [vmem:[#allocation5 + $0x68] sm:$0xf]
    %v1715 = vld [vmem:[#allocation5 + $0x6c] sm:$0xf]
    %v1716 = vld [vmem:[#allocation5 + $0x70] sm:$0xf]
    %v1717 = vld [vmem:[#allocation5 + $0x74] sm:$0xf]
    %v1718 = vld [vmem:[#allocation5 + $0x78] sm:$0xf]
    %v1719 = vld [vmem:[#allocation5 + $0x7c] sm:$0xf]
    %v1720 = vld [vmem:[#allocation5 + $0x80] sm:$0xf]
    %v1721 = vld [vmem:[#allocation5 + $0x84] sm:$0xf]
    %v1722 = vld [vmem:[#allocation5 + $0x88] sm:$0xf]
    %v1723 = vld [vmem:[#allocation5 + $0x8c] sm:$0xf]
    %v1724 = vld [vmem:[#allocation5 + $0x90] sm:$0xf]
    %v1725 = vld [vmem:[#allocation5 + $0x94] sm:$0xf]
    %v1726 = vld [vmem:[#allocation5 + $0x98] sm:$0xf]
    %v1727 = vld [vmem:[#allocation5 + $0x9c] sm:$0xf]
    %v1728 = vld [vmem:[#allocation5 + $0xa0] sm:$0xf]
    %v1729 = vld [vmem:[#allocation5 + $0xa4] sm:$0xf]
    %v1730 = vld [vmem:[#allocation5 + $0xa8] sm:$0xf]
    %v1731 = vld [vmem:[#allocation5 + $0xac] sm:$0xf]
    %v1732 = vld [vmem:[#allocation5 + $0xb0] sm:$0xf]
    %v1733 = vld [vmem:[#allocation5 + $0xb4] sm:$0xf]
    %v1734 = vld [vmem:[#allocation5 + $0xb8] sm:$0xf]
    %v1735 = vld [vmem:[#allocation5 + $0xbc] sm:$0xf]
    %v1784 = vunpack.c.l.b16 %v1688
    %v1785 = vunpack.c.l.b16 %v1689
    %v1786 = vunpack.c.l.b16 %v1690
    %v1787 = vunpack.c.l.b16 %v1691
    %v1788 = vunpack.c.l.b16 %v1692
    %v1789 = vunpack.c.l.b16 %v1693
    %v1790 = vunpack.c.l.b16 %v1694
    %v1791 = vunpack.c.l.b16 %v1695
    %v1792 = vunpack.c.l.b16 %v1696
    %v1793 = vunpack.c.l.b16 %v1697
    %v1794 = vunpack.c.l.b16 %v1698
    %v1795 = vunpack.c.l.b16 %v1699
    %v1796 = vunpack.c.l.b16 %v1700
    %v1797 = vunpack.c.l.b16 %v1701
    %v1798 = vunpack.c.l.b16 %v1702
    %v1799 = vunpack.c.l.b16 %v1703
    %v1800 = vunpack.c.l.b16 %v1704
    %v1801 = vunpack.c.l.b16 %v1705
    %v1802 = vunpack.c.l.b16 %v1706
    %v1803 = vunpack.c.l.b16 %v1707
    %v1804 = vunpack.c.l.b16 %v1708
    %v1805 = vunpack.c.l.b16 %v1709
    %v1806 = vunpack.c.l.b16 %v1710
    %v1807 = vunpack.c.l.b16 %v1711
    %v1808 = vunpack.c.l.b16 %v1712
    %v1809 = vunpack.c.l.b16 %v1713
    %v1810 = vunpack.c.l.b16 %v1714
    %v1811 = vunpack.c.l.b16 %v1715
    %v1812 = vunpack.c.l.b16 %v1716
    %v1813 = vunpack.c.l.b16 %v1717
    %v1814 = vunpack.c.l.b16 %v1718
    %v1815 = vunpack.c.l.b16 %v1719
    %v1816 = vunpack.c.l.b16 %v1720
    %v1817 = vunpack.c.l.b16 %v1721
    %v1818 = vunpack.c.l.b16 %v1722
    %v1819 = vunpack.c.l.b16 %v1723
    %v1820 = vunpack.c.l.b16 %v1724
    %v1821 = vunpack.c.l.b16 %v1725
    %v1822 = vunpack.c.l.b16 %v1726
    %v1823 = vunpack.c.l.b16 %v1727
    %v1824 = vunpack.c.l.b16 %v1728
    %v1825 = vunpack.c.l.b16 %v1729
    %v1826 = vunpack.c.l.b16 %v1730
    %v1827 = vunpack.c.l.b16 %v1731
    %v1828 = vunpack.c.l.b16 %v1732
    %v1829 = vunpack.c.l.b16 %v1733
    %v1830 = vunpack.c.l.b16 %v1734
    %v1831 = vunpack.c.l.b16 %v1735
    %v1832 = vpack.c.b16 %v1785, %v1784
    %v1833 = vpack.c.b16 %v1787, %v1786
    %v1834 = vpack.c.b16 %v1789, %v1788
    %v1835 = vpack.c.b16 %v1791, %v1790
    %v1836 = vpack.c.b16 %v1793, %v1792
    %v1837 = vpack.c.b16 %v1795, %v1794
    %v1838 = vpack.c.b16 %v1797, %v1796
    %v1839 = vpack.c.b16 %v1799, %v1798
    %v1840 = vpack.c.b16 %v1801, %v1800
    %v1841 = vpack.c.b16 %v1803, %v1802
    %v1842 = vpack.c.b16 %v1805, %v1804
    %v1843 = vpack.c.b16 %v1807, %v1806
    %v1844 = vpack.c.b16 %v1809, %v1808
    %v1845 = vpack.c.b16 %v1811, %v1810
    %v1846 = vpack.c.b16 %v1813, %v1812
    %v1847 = vpack.c.b16 %v1815, %v1814
    %v1848 = vpack.c.b16 %v1817, %v1816
    %v1849 = vpack.c.b16 %v1819, %v1818
    %v1850 = vpack.c.b16 %v1821, %v1820
    %v1851 = vpack.c.b16 %v1823, %v1822
    %v1852 = vpack.c.b16 %v1825, %v1824
    %v1853 = vpack.c.b16 %v1827, %v1826
    %v1854 = vpack.c.b16 %v1829, %v1828
    %v1855 = vpack.c.b16 %v1831, %v1830
    %1880 = vmatprep.subr.bf16.mxu0 0
    %1881 = vmatpush1.bf16.msra.mxu0 %v1839
    %1882 = vmatprep.subr.bf16.mxu0 0
    %1883 = vmatpush1.bf16.msra.mxu0 %v1838
    %1884 = vmatprep.subr.bf16.mxu0 0
    %1885 = vmatpush1.bf16.msra.mxu0 %v1837
    %1886 = vmatprep.subr.bf16.mxu0 0
    %1887 = vmatpush1.bf16.msra.mxu0 %v1836
    %1888 = vmatprep.subr.bf16.mxu0 0
    %1889 = vmatpush1.bf16.msra.mxu0 %v1835
    %1890 = vmatprep.subr.bf16.mxu0 0
    %1891 = vmatpush1.bf16.msra.mxu0 %v1834
    %1892 = vmatprep.subr.bf16.mxu0 0
    %1893 = vmatpush1.bf16.msra.mxu0 %v1833
    %1894 = vmatprep.subr.bf16.mxu0 0
    %1895 = vmatpush1.bf16.msra.mxu0 %v1832
    %1896 = vmatprep.subr.bf16.mxu0 0
    %1897 = vmatpush2.bf16.msra.mxu0 %v1847
    %1898 = vmatprep.subr.bf16.mxu0 0
    %1899 = vmatpush2.bf16.msra.mxu0 %v1846
    %1900 = vmatprep.subr.bf16.mxu0 0
    %1901 = vmatpush2.bf16.msra.mxu0 %v1845
    %1902 = vmatprep.subr.bf16.mxu0 0
    %1903 = vmatpush2.bf16.msra.mxu0 %v1844
    %1904 = vmatprep.subr.bf16.mxu0 0
    %1905 = vmatpush2.bf16.msra.mxu0 %v1843
    %1906 = vmatprep.subr.bf16.mxu0 0
    %1907 = vmatpush2.bf16.msra.mxu0 %v1842
    %1908 = vmatprep.subr.bf16.mxu0 0
    %1909 = vmatpush2.bf16.msra.mxu0 %v1841
    %1910 = vmatprep.subr.bf16.mxu0 0
    %1911 = vmatpush2.bf16.msra.mxu0 %v1840
    %1912 = vmatprep.mubr.bf16.mxu0 %v1686
    %1913 = vmatmul.mubr.bf16.gmra.mxu0 %v1685
    %v1914 = vpop.f32.mrf.mxu0
    %v1915 = vadd.f32 0.0, %v1914
    %v1916 = vpop.f32.mrf.mxu0
    %v1917 = vpop.f32.mrf.mxu0
    %v1918 = vpop.f32.mrf.mxu0
    %1919 = vdwg.mxu0
    %1920 = vmatprep.subr.bf16.mxu0 0
    %1921 = vmatpush1.bf16.msra.mxu0 %v1855
    %1922 = vmatprep.subr.bf16.mxu0 0
    %1923 = vmatpush1.bf16.msra.mxu0 %v1854
    %1924 = vmatprep.subr.bf16.mxu0 0
    %1925 = vmatpush1.bf16.msra.mxu0 %v1853
    %1926 = vmatprep.subr.bf16.mxu0 0
    %1927 = vmatpush1.bf16.msra.mxu0 %v1852
    %1928 = vmatprep.subr.bf16.mxu0 0
    %1929 = vmatpush1.bf16.msra.mxu0 %v1851
    %1930 = vmatprep.subr.bf16.mxu0 0
    %1931 = vmatpush1.bf16.msra.mxu0 %v1850
    %1932 = vmatprep.subr.bf16.mxu0 0
    %1933 = vmatpush1.bf16.msra.mxu0 %v1849
    %1934 = vmatprep.subr.bf16.mxu0 0
    %1935 = vmatpush1.bf16.msra.mxu0 %v1848
    %1936 = vmatprep.subr.bf16.mxu0 0
    %1937 = vmatpush2.bf16.msra.mxu0 0
    %1938 = vmatprep.subr.bf16.mxu0 0
    %1939 = vmatpush2.bf16.msra.mxu0 0
    %1940 = vmatprep.subr.bf16.mxu0 0
    %1941 = vmatpush2.bf16.msra.mxu0 0
    %1942 = vmatprep.subr.bf16.mxu0 0
    %1943 = vmatpush2.bf16.msra.mxu0 0
    %1944 = vmatprep.subr.bf16.mxu0 0
    %1945 = vmatpush2.bf16.msra.mxu0 0
    %1946 = vmatprep.subr.bf16.mxu0 0
    %1947 = vmatpush2.bf16.msra.mxu0 0
    %1948 = vmatprep.subr.bf16.mxu0 0
    %1949 = vmatpush2.bf16.msra.mxu0 0
    %1950 = vmatprep.subr.bf16.mxu0 0
    %1951 = vmatpush2.bf16.msra.mxu0 0
    %1952 = vmatprep.mubr.bf16.mxu0 0
    %1953 = vmatmul.mubr.bf16.gmra.mxu0 %v1687
    %v1954 = vpop.f32.mrf.mxu0
    %v1955 = vadd.f32 %v1915, %v1954
    %v1956 = vpop.f32.mrf.mxu0
    %v1957 = vpop.f32.mrf.mxu0
    %v1958 = vpop.f32.mrf.mxu0
    %1959 = vdwg.mxu0
    %v1960 = vrot.slane %v1955, 4
    %v1961 = vadd.f32 %v1955, %v1960
    %v1962 = vrot.slane %v1961, 2
    %v1963 = vadd.f32 %v1961, %v1962
    %v1964 = vrot.slane %v1963, 1
    %v1965 = vadd.f32 %v1963, %v1964
    %v1966 = vmul.f32 %v1955, %v1955
    %v1967 = vrot.slane %v1966, 4
    %v1968 = vadd.f32 %v1966, %v1967
    %v1969 = vrot.slane %v1968, 2
    %v1970 = vadd.f32 %v1968, %v1969
    %v1971 = vrot.slane %v1970, 1
    %v1972 = vadd.f32 %v1970, %v1971
    %v1973 = vmul.f32 %v1965, 0.125
    %v1974 = vmul.f32 %v1972, 0.125
    %v1975 = vmul.f32 %v1973, %v1973
    %v1976 = vsub.f32 %v1974, %v1975
    %v1977 = vadd.f32 %v1976, 1e-05
    %v1978 = vrsqrt.pop %v1977
    %v1979 = vmul.f32 %v52, %v1978
    %v1980 = vmul.f32 %v1973, %v1979
    %v1981 = vsub.f32 %v53, %v1980
    %v1983 = vlaneseq
    %v1984 = vshrl.u32 %v1983, 7
    %v1985 = vsub.s32 0, %v1984
    %v1986 = vrot.slane %v1979, %v1985
    %v1988 = vmul.f32 %v1955, %v1986
    %v1990 = vlaneseq
    %v1991 = vshrl.u32 %v1990, 7
    %v1992 = vsub.s32 0, %v1991
    %v1993 = vrot.slane %v1981, %v1992
    %v1995 = vadd.f32 %v1988, %v1993
    %v1996 = vmax.f32 %v1995, 0.0
    %v1997 = vpack.c.bf16 %v1996, %v1996
    %v1998 = vld [vmem:[%s3] sm:$0xf]
    %v1999 = vld [vmem:[%s3 + $0x4] sm:$0xf]
    %v2000 = vld [vmem:[%s3 + $0x8] sm:$0xf]
    %v2001 = vld [vmem:[%s3 + $0xc] sm:$0xf]
    %v2002 = vld [vmem:[%s3 + $0x10] sm:$0xf]
    %v2003 = vld [vmem:[%s3 + $0x14] sm:$0xf]
    %v2004 = vld [vmem:[%s3 + $0x18] sm:$0xf]
    %v2005 = vld [vmem:[%s3 + $0x1c] sm:$0xf]
    %v2006 = vld [vmem:[%s3 + $0x20] sm:$0xf]
    %v2007 = vld [vmem:[%s3 + $0x24] sm:$0xf]
    %v2008 = vld [vmem:[%s3 + $0x28] sm:$0xf]
    %v2009 = vld [vmem:[%s3 + $0x2c] sm:$0xf]
    %v2010 = vld [vmem:[%s3 + $0x30] sm:$0xf]
    %v2011 = vld [vmem:[%s3 + $0x34] sm:$0xf]
    %v2012 = vld [vmem:[%s3 + $0x38] sm:$0xf]
    %v2013 = vld [vmem:[%s3 + $0x3c] sm:$0xf]
    %v2015 = vlaneseq
    %v2016 = vshrl.u32 %v2015, 7
    %v2017 = vsub.s32 0, %v2016
    %v2018 = vrot.slane %v54, %v2017
    %v2036 = vunpack.c.l.b16 %v1998
    %v2037 = vunpack.c.l.b16 %v1999
    %v2038 = vunpack.c.l.b16 %v2000
    %v2039 = vunpack.c.l.b16 %v2001
    %v2040 = vunpack.c.l.b16 %v2002
    %v2041 = vunpack.c.l.b16 %v2003
    %v2042 = vunpack.c.l.b16 %v2004
    %v2043 = vunpack.c.l.b16 %v2005
    %v2044 = vunpack.c.l.b16 %v2006
    %v2045 = vunpack.c.l.b16 %v2007
    %v2046 = vunpack.c.l.b16 %v2008
    %v2047 = vunpack.c.l.b16 %v2009
    %v2048 = vunpack.c.l.b16 %v2010
    %v2049 = vunpack.c.l.b16 %v2011
    %v2050 = vunpack.c.l.b16 %v2012
    %v2051 = vunpack.c.l.b16 %v2013
    %v2052 = vpack.c.b16 %v2037, %v2036
    %v2053 = vpack.c.b16 %v2039, %v2038
    %v2054 = vpack.c.b16 %v2041, %v2040
    %v2055 = vpack.c.b16 %v2043, %v2042
    %v2056 = vpack.c.b16 %v2045, %v2044
    %v2057 = vpack.c.b16 %v2047, %v2046
    %v2058 = vpack.c.b16 %v2049, %v2048
    %v2059 = vpack.c.b16 %v2051, %v2050
    %2068 = vmatprep.subr.bf16.mxu0 0
    %2069 = vmatpush1.bf16.msra.mxu0 %v2059
    %2070 = vmatprep.subr.bf16.mxu0 0
    %2071 = vmatpush1.bf16.msra.mxu0 %v2058
    %2072 = vmatprep.subr.bf16.mxu0 0
    %2073 = vmatpush1.bf16.msra.mxu0 %v2057
    %2074 = vmatprep.subr.bf16.mxu0 0
    %2075 = vmatpush1.bf16.msra.mxu0 %v2056
    %2076 = vmatprep.subr.bf16.mxu0 0
    %2077 = vmatpush1.bf16.msra.mxu0 %v2055
    %2078 = vmatprep.subr.bf16.mxu0 0
    %2079 = vmatpush1.bf16.msra.mxu0 %v2054
    %2080 = vmatprep.subr.bf16.mxu0 0
    %2081 = vmatpush1.bf16.msra.mxu0 %v2053
    %2082 = vmatprep.subr.bf16.mxu0 0
    %2083 = vmatpush1.bf16.msra.mxu0 %v2052
    %2084 = vmatprep.subr.bf16.mxu0 0
    %2085 = vmatpush2.bf16.msra.mxu0 0
    %2086 = vmatprep.subr.bf16.mxu0 0
    %2087 = vmatpush2.bf16.msra.mxu0 0
    %2088 = vmatprep.subr.bf16.mxu0 0
    %2089 = vmatpush2.bf16.msra.mxu0 0
    %2090 = vmatprep.subr.bf16.mxu0 0
    %2091 = vmatpush2.bf16.msra.mxu0 0
    %2092 = vmatprep.subr.bf16.mxu0 0
    %2093 = vmatpush2.bf16.msra.mxu0 0
    %2094 = vmatprep.subr.bf16.mxu0 0
    %2095 = vmatpush2.bf16.msra.mxu0 0
    %2096 = vmatprep.subr.bf16.mxu0 0
    %2097 = vmatpush2.bf16.msra.mxu0 0
    %2098 = vmatprep.subr.bf16.mxu0 0
    %2099 = vmatpush2.bf16.msra.mxu0 0
    %2100 = vmatprep.mubr.bf16.mxu0 0
    %2101 = vmatmul.mubr.bf16.gmra.mxu0 %v1997
    %v2102 = vpop.f32.mrf.mxu0
    %v2103 = vadd.f32 %v2018, %v2102
    %v2104 = vpop.f32.mrf.mxu0
    %v2105 = vpop.f32.mrf.mxu0
    %v2106 = vpop.f32.mrf.mxu0
    %2107 = vdwg.mxu0
    %2108 = vst [vmem:[#allocation7] sm:$0xff] %v2103
    // Predicated region
    $region30: #{fully_connected_net.1} parent=1 // pred_check
      _
    $region31: #{fully_connected_net.1} parent=1 // pred_check_branch
      %2110 = sbr.rel (0) target = $region33
    $region32: #{fully_connected_net.1} parent=1 // pred_region
      %s2112 = ssub.s32 128, 128
      %2113 = vsyncadd [#allocation4], %s2112
      %s2115 = sshll.u32 [#allocation7], 4
      %s2116 = int_to_ptr.vmem [resolvable:$true] %s2115
      %2118 = dma.vmem_to_hbm [thread:$0]  %s2116, 128, %s5, [#allocation4]
    $region33: #{fully_connected_net.1} parent=1 // pred_fallthru
      _
    // Predicated region
    $region34: #{fully_connected_net.1} parent=1 // pred_check
      _
    $region35: #{fully_connected_net.1} parent=1 // pred_check_branch
      %2120 = sbr.rel (0) target = $region37
    $region36: #{fully_connected_net.1} parent=1 // pred_region
      %2121 = dma.done [#allocation4], 128
    $region37: #{fully_connected_net.1} parent=1 // pred_fallthru
      _
    %2122 = vsyncpa [#allocation3], 1
    %2123 = vsyncpa [#allocation6], 1
    %2124 = vsyncpa [#allocation4], 1

</llo_original>
